<compile_context>
chip_gen: v5e
topology: v5e:2x2
jax: 0.10.0
libtpu: 0.0.40
codegen_flags: <defaults>
</compile_context>

<pallas_src>
import functools

import jax
import jax.numpy as jnp
from jax import lax
from jax.experimental import pallas as pl
from jax.experimental.pallas import tpu as pltpu


def _upsample_kernel(x_ref, wc_ref, bc_ref, alpha_ref, o_ref, xs_ref, *,
                     H, W, C, C_out, TH):
    """One (image, row-tile) step of the fused conv + bias + PReLU.

    x_ref:     (1, H*W, C)         whole image, channels-last, resident per n
    wc_ref:    (9*C, C_out)        combined depthwise*pointwise weights
    bc_ref:    (1, C_out)          combined bias (dw_b @ pw_w + pw_b)
    alpha_ref: (1, C_out)          PReLU alpha repeated r^2 per channel
    o_ref:     (1, TH*W, C_out)    output row-tile (pre-PixelShuffle layout)
    xs_ref:    ((H+2)*W + 8, C)    zero-padded resident image scratch (f32)
    """
    t = pl.program_id(1)
    S = TH * W

    # Once per image: build the H-padded resident copy of the input
    # (replaces the wrapper-side jnp.pad -> no extra HBM round trip).
    @pl.when(t == 0)
    def _():
        xs_ref[pl.ds(0, W + 1), :] = jnp.zeros((W + 1, C), xs_ref.dtype)
        xs_ref[pl.ds(1 + (H + 1) * W, W + 7), :] = jnp.zeros((W + 7, C),
                                                             xs_ref.dtype)
        xs_ref[pl.ds(1 + W, H * W), :] = x_ref[0].astype(xs_ref.dtype)

    # im2col: each of the 9 taps of this row-tile is one contiguous sublane
    # slice of the padded flat image (flat shift = dh*W + dw).  The H halo is
    # real zeros in the scratch; only W wrap-around columns need masking.
    w_idx = lax.broadcasted_iota(jnp.int32, (S, 1), 0) % W
    base = 1 + t * (TH * W)
    taps = []
    for kh in range(3):
        for kw in range(3):
            start = base + kh * W + (kw - 1)
            piece = xs_ref[pl.ds(start, S), :]            # (S, C)
            dw = kw - 1
            if dw != 0:
                valid = jnp.logical_and(w_idx + dw >= 0, w_idx + dw < W)
                piece = jnp.where(valid, piece, 0.0)
            taps.append(piece)
    patches = jnp.concatenate(taps, axis=1)               # (S, 9*C)

    # Fused depthwise + pointwise conv: one MXU matmul with K = 9*C.
    y = jnp.dot(patches, wc_ref[...].astype(jnp.float32),
                preferred_element_type=jnp.float32)        # (S, C_out)
    y = y + bc_ref[0].astype(jnp.float32)

    # PReLU (alpha already expanded to C_out = C * r^2 channels).
    alpha = alpha_ref[0].astype(jnp.float32)
    y = jnp.where(y > 0, y, alpha * y)

    # Lane-dense 2-D store, no in-kernel reshape.
    o_ref[0] = y.astype(o_ref.dtype)


def _pick_row_tile(H, W):
    """Largest row-tile TH < H dividing H with (TH*W) % 8 == 0 and a
    moderate block size (gives >= 2 pipeline steps per image when possible).
    Falls back to TH = H (block == full array, always legal)."""
    best = None
    for th in range(1, H):
        if H % th == 0 and (th * W) % 8 == 0 and th * W <= 4096:
            best = th
    return best if best is not None else H


def upsample_block(x_nchw, dw_w, dw_b, pw_w, pw_b, alpha, scale_factor):
    """Runs UpsampleBlock.forward.  x_nchw: (N, C, H, W).  Returns NCHW."""
    N, C, H, W = x_nchw.shape
    r = scale_factor
    C_out = C * r * r
    assert dw_w.shape == (3, 3, C) and pw_w.shape == (C, C_out)

    TH = _pick_row_tile(H, W)
    T = H // TH

    # NCHW -> (N, H*W, C): channels on lanes, spatial flattened on sublanes.
    # Single small-tensor XLA pass; no jnp.pad anywhere.
    x3 = jnp.transpose(x_nchw, (0, 2, 3, 1)).reshape(N, H * W, C)

    f32 = jnp.float32
    # Fold depthwise into the pointwise matmul: K = 9*C.
    wc = (dw_w.astype(f32).reshape(9, C, 1) *
          pw_w.astype(f32).reshape(1, C, C_out)).reshape(9 * C, C_out)
    bc = (dw_b.astype(f32) @ pw_w.astype(f32) + pw_b.astype(f32)).reshape(1, C_out)
    # PReLU commutes with PixelShuffle when alpha is repeated r^2 times
    # (PyTorch channel order is c*r^2 + r1*r + r2).
    alpha_exp = jnp.repeat(alpha.astype(f32), r * r).reshape(1, C_out)

    kernel = functools.partial(_upsample_kernel, H=H, W=W, C=C, C_out=C_out,
                               TH=TH)

    # NOTE: the input block is kept resident per image; for very large SR
    # inputs on v7x the input itself should also be H-tiled (halo DMA).
    y = pl.pallas_call(
        kernel,
        out_shape=jax.ShapeDtypeStruct((N, H * W, C_out), x_nchw.dtype),
        grid_spec=pltpu.PrefetchScalarGridSpec(
            num_scalar_prefetch=0,
            grid=(N, T),
            in_specs=[
                pl.BlockSpec((1, H * W, C), lambda n, t: (n, 0, 0)),
                pl.BlockSpec((9 * C, C_out), lambda n, t: (0, 0)),
                pl.BlockSpec((1, C_out), lambda n, t: (0, 0)),
                pl.BlockSpec((1, C_out), lambda n, t: (0, 0)),
            ],
            out_specs=pl.BlockSpec((1, TH * W, C_out), lambda n, t: (n, t, 0)),
            scratch_shapes=[pltpu.VMEM(((H + 2) * W + 8, C), f32)],
        ),
        compiler_params=pltpu.CompilerParams(
            dimension_semantics=("parallel", "arbitrary"),
            vmem_limit_bytes=32 * 1024 * 1024),
    )(x3, wc, bc, alpha_exp)

    # TODO(synk): fuse this PixelShuffle lane/sublane interleave into the
    # kernel's store (strided writes) to save the final XLA transpose pass.
    y = y.reshape(N, H, W, C, r, r)
    y = jnp.transpose(y, (0, 3, 1, 4, 2, 5))               # (N, C, H, r, W, r)
    return y.reshape(N, C, H * r, W * r)


def _reference(x_nchw, dw_w, dw_b, pw_w, pw_b, alpha, r):
    """Pure-JAX reference of the PyTorch forward, for validation."""
    N, C, H, W = x_nchw.shape
    C_out = C * r * r
    # depthwise conv, groups=C:  torch weight (C,1,3,3) <-> dw_w (3,3,C)
    w_dw = jnp.transpose(dw_w, (2, 0, 1))[:, None, :, :]
    y = lax.conv_general_dilated(
        x_nchw, w_dw, window_strides=(1, 1), padding=((1, 1), (1, 1)),
        dimension_numbers=("NCHW", "OIHW", "NCHW"), feature_group_count=C)
    y = y + dw_b.reshape(1, C, 1, 1)
    # pointwise 1x1:  torch weight (C_out,C,1,1) <-> pw_w (C,C_out)
    w_pw = jnp.transpose(pw_w, (1, 0))[:, :, None, None]
    y = lax.conv_general_dilated(
        y, w_pw, window_strides=(1, 1), padding=((0, 0), (0, 0)),
        dimension_numbers=("NCHW", "OIHW", "NCHW"))
    y = y + pw_b.reshape(1, C_out, 1, 1)
    # pixel shuffle
    y = y.reshape(N, C, r, r, H, W)
    y = jnp.transpose(y, (0, 1, 4, 2, 5, 3)).reshape(N, C, H * r, W * r)
    # PReLU per channel
    a = alpha.reshape(1, C, 1, 1)
    return jnp.where(y > 0, y, a * y)


if __name__ == "__main__":
    key = jax.random.PRNGKey(0)
    N, C, H, W = 2, 4, 16, 16
    r = 2
    C_out = C * r * r

    k = jax.random.split(key, 6)
    x = jax.random.normal(k[0], (N, C, H, W), jnp.float32)
    dw_w = jax.random.normal(k[1], (3, 3, C), jnp.float32) * 0.1   # depthwise
    dw_b = jax.random.normal(k[2], (C,), jnp.float32) * 0.1
    pw_w = jax.random.normal(k[3], (C, C_out), jnp.float32) * 0.1  # pointwise
    pw_b = jax.random.normal(k[4], (C_out,), jnp.float32) * 0.1
    alpha = jnp.full((C,), 0.25, jnp.float32)                      # PReLU init

    out = upsample_block(x, dw_w, dw_b, pw_w, pw_b, alpha, r)
    out = jax.block_until_ready(out)
    assert out.shape == (N, C, H * r, W * r), out.shape

    ref = _reference(x, dw_w, dw_b, pw_w, pw_b, alpha, r)
    assert jnp.allclose(out, ref, atol=1e-4, rtol=1e-4), \
        float(jnp.max(jnp.abs(out - ref)))

    print("KERNEL_OK")
</pallas_src>

<mosaic_0001>
module attributes {stable_mosaic.version = 11 : i64} {
  func.func @_upsample_kernel(%arg0: i32, %arg1: i32, %arg2: memref<1x256x4xf32, #tpu.memory_space<vmem>>, %arg3: memref<36x16xf32, #tpu.memory_space<vmem>>, %arg4: memref<1x16xf32, #tpu.memory_space<vmem>>, %arg5: memref<1x16xf32, #tpu.memory_space<vmem>>, %arg6: memref<1x128x16xf32, #tpu.memory_space<vmem>>, %arg7: memref<296x4xf32, #tpu.memory_space<vmem>>) attributes {dimension_semantics = [#tpu.dimension_semantics<parallel>, #tpu.dimension_semantics<arbitrary>], iteration_bounds = array<i64: 2, 2>, scalar_prefetch = 0 : i64, scratch_operands = 1 : i64, tpu.core_type = #tpu.core_type<tc>, window_params = [{transform_indices = @transform_0, window_bounds = array<i64: 1, 256, 4>}, {pipeline_mode = #tpu.pipeline_mode<synchronous>, transform_indices = @transform_1, window_bounds = array<i64: 36, 16>}, {pipeline_mode = #tpu.pipeline_mode<synchronous>, transform_indices = @transform_2, window_bounds = array<i64: 1, 16>}, {pipeline_mode = #tpu.pipeline_mode<synchronous>, transform_indices = @transform_3, window_bounds = array<i64: 1, 16>}, {transform_indices = @transform_4, window_bounds = array<i64: 1, 128, 16>}]} {
    %c0_i32 = arith.constant 0 : i32
    %0 = arith.cmpi eq, %arg1, %c0_i32 : i32
    %1 = arith.extui %0 : i1 to i32
    %c0_i32_0 = arith.constant 0 : i32
    %2 = arith.cmpi ne, %1, %c0_i32_0 : i32
    scf.if %2 {
      %cst_70 = arith.constant 0.000000e+00 : f32
      %155 = vector.broadcast %cst_70 : f32 to vector<17x4xf32>
      %c0_71 = arith.constant 0 : index
      %c0_72 = arith.constant 0 : index
      %156 = vector.load %arg7[%c0_71, %c0_72] : memref<296x4xf32, #tpu.memory_space<vmem>>, vector<17x4xf32>
      tpu.vector_store %arg7[%c0_71, %c0_72], %155 {strides = array<i32>} : memref<296x4xf32, #tpu.memory_space<vmem>>, vector<17x4xf32>,
      %cst_73 = arith.constant 0.000000e+00 : f32
      %157 = vector.broadcast %cst_73 : f32 to vector<23x4xf32>
      %c273 = arith.constant 273 : index
      %c0_74 = arith.constant 0 : index
      %158 = vector.load %arg7[%c273, %c0_74] : memref<296x4xf32, #tpu.memory_space<vmem>>, vector<23x4xf32>
      tpu.vector_store %arg7[%c273, %c0_74], %157 {strides = array<i32>} : memref<296x4xf32, #tpu.memory_space<vmem>>, vector<23x4xf32>,
      %c0_75 = arith.constant 0 : index
      %c0_76 = arith.constant 0 : index
      %c0_77 = arith.constant 0 : index
      %159 = vector.load %arg2[%c0_75, %c0_76, %c0_77] : memref<1x256x4xf32, #tpu.memory_space<vmem>>, vector<1x256x4xf32>
      %160 = vector.shape_cast %159 : vector<1x256x4xf32> to vector<256x4xf32>
      %c17 = arith.constant 17 : index
      %c0_78 = arith.constant 0 : index
      %161 = vector.load %arg7[%c17, %c0_78] : memref<296x4xf32, #tpu.memory_space<vmem>>, vector<256x4xf32>
      tpu.vector_store %arg7[%c17, %c0_78], %160 {strides = array<i32>} : memref<296x4xf32, #tpu.memory_space<vmem>>, vector<256x4xf32>,
    } else {
    }
    %3 = tpu.iota {dimensions = array<i32: 0>} : vector<128x1xi32>
    %c16_i32 = arith.constant 16 : i32
    %c0_i32_1 = arith.constant 0 : i32
    %4 = arith.cmpi eq, %c16_i32, %c0_i32_1 : i32
    %c1_i32 = arith.constant 1 : i32
    %5 = arith.select %4, %c1_i32, %c16_i32 : i32
    %6 = vector.broadcast %5 : i32 to vector<128x1xi32>
    %7 = arith.remsi %3, %6 : vector<128x1xi32>
    %c0_i32_2 = arith.constant 0 : i32
    %8 = vector.broadcast %c0_i32_2 : i32 to vector<128x1xi32>
    %9 = arith.cmpi ne, %7, %8 : vector<128x1xi32>
    %c0_i32_3 = arith.constant 0 : i32
    %10 = vector.broadcast %c0_i32_3 : i32 to vector<128x1xi32>
    %11 = arith.cmpi slt, %7, %10 : vector<128x1xi32>
    %c0_i32_4 = arith.constant 0 : i32
    %12 = arith.cmpi slt, %5, %c0_i32_4 : i32
    %13 = vector.broadcast %12 : i1 to vector<128x1xi1>
    %14 = vector.broadcast %13 : vector<128x1xi1> to vector<128x1xi1>
    %15 = arith.xori %11, %14 : vector<128x1xi1>
    %16 = arith.andi %15, %9 : vector<128x1xi1>
    %17 = vector.broadcast %5 : i32 to vector<128x1xi32>
    %18 = arith.addi %7, %17 : vector<128x1xi32>
    %19 = arith.select %16, %18, %7 : vector<128x1xi1>, vector<128x1xi32>
    %c128_i32 = arith.constant 128 : i32
    %20 = arith.muli %arg1, %c128_i32 : i32
    %c1_i32_5 = arith.constant 1 : i32
    %21 = arith.addi %c1_i32_5, %20 : i32
    %c0_i32_6 = arith.constant 0 : i32
    %22 = arith.addi %21, %c0_i32_6 : i32
    %c-1_i32 = arith.constant -1 : i32
    %23 = arith.addi %22, %c-1_i32 : i32
    %24 = arith.index_cast %23 : i32 to index
    %c0 = arith.constant 0 : index
    %25 = vector.load %arg7[%24, %c0] : memref<296x4xf32, #tpu.memory_space<vmem>>, vector<128x4xf32>
    %c-1_i32_7 = arith.constant -1 : i32
    %26 = vector.broadcast %c-1_i32_7 : i32 to vector<128x1xi32>
    %27 = arith.addi %19, %26 : vector<128x1xi32>
    %c0_i32_8 = arith.constant 0 : i32
    %28 = vector.broadcast %c0_i32_8 : i32 to vector<128x1xi32>
    %29 = arith.cmpi sge, %27, %28 : vector<128x1xi32>
    %c-1_i32_9 = arith.constant -1 : i32
    %30 = vector.broadcast %c-1_i32_9 : i32 to vector<128x1xi32>
    %31 = arith.addi %19, %30 : vector<128x1xi32>
    %c16_i32_10 = arith.constant 16 : i32
    %32 = vector.broadcast %c16_i32_10 : i32 to vector<128x1xi32>
    %33 = arith.cmpi slt, %31, %32 : vector<128x1xi32>
    %34 = arith.andi %29, %33 : vector<128x1xi1>
    %cst = arith.constant 0.000000e+00 : f32
    %35 = vector.shape_cast %34 : vector<128x1xi1> to vector<128x1xi1>
    %36 = vector.broadcast %35 : vector<128x1xi1> to vector<128x4xi1>
    %37 = vector.broadcast %cst : f32 to vector<128x4xf32>
    %38 = arith.select %36, %25, %37 : vector<128x4xi1>, vector<128x4xf32>
    %c0_i32_11 = arith.constant 0 : i32
    %39 = arith.addi %21, %c0_i32_11 : i32
    %c0_i32_12 = arith.constant 0 : i32
    %40 = arith.addi %39, %c0_i32_12 : i32
    %41 = arith.index_cast %40 : i32 to index
    %c0_13 = arith.constant 0 : index
    %42 = vector.load %arg7[%41, %c0_13] : memref<296x4xf32, #tpu.memory_space<vmem>>, vector<128x4xf32>
    %c0_i32_14 = arith.constant 0 : i32
    %43 = arith.addi %21, %c0_i32_14 : i32
    %c1_i32_15 = arith.constant 1 : i32
    %44 = arith.addi %43, %c1_i32_15 : i32
    %45 = arith.index_cast %44 : i32 to index
    %c0_16 = arith.constant 0 : index
    %46 = vector.load %arg7[%45, %c0_16] : memref<296x4xf32, #tpu.memory_space<vmem>>, vector<128x4xf32>
    %c1_i32_17 = arith.constant 1 : i32
    %47 = vector.broadcast %c1_i32_17 : i32 to vector<128x1xi32>
    %48 = arith.addi %19, %47 : vector<128x1xi32>
    %c0_i32_18 = arith.constant 0 : i32
    %49 = vector.broadcast %c0_i32_18 : i32 to vector<128x1xi32>
    %50 = arith.cmpi sge, %48, %49 : vector<128x1xi32>
    %c1_i32_19 = arith.constant 1 : i32
    %51 = vector.broadcast %c1_i32_19 : i32 to vector<128x1xi32>
    %52 = arith.addi %19, %51 : vector<128x1xi32>
    %c16_i32_20 = arith.constant 16 : i32
    %53 = vector.broadcast %c16_i32_20 : i32 to vector<128x1xi32>
    %54 = arith.cmpi slt, %52, %53 : vector<128x1xi32>
    %55 = arith.andi %50, %54 : vector<128x1xi1>
    %cst_21 = arith.constant 0.000000e+00 : f32
    %56 = vector.shape_cast %55 : vector<128x1xi1> to vector<128x1xi1>
    %57 = vector.broadcast %56 : vector<128x1xi1> to vector<128x4xi1>
    %58 = vector.broadcast %cst_21 : f32 to vector<128x4xf32>
    %59 = arith.select %57, %46, %58 : vector<128x4xi1>, vector<128x4xf32>
    %c16_i32_22 = arith.constant 16 : i32
    %60 = arith.addi %21, %c16_i32_22 : i32
    %c-1_i32_23 = arith.constant -1 : i32
    %61 = arith.addi %60, %c-1_i32_23 : i32
    %62 = arith.index_cast %61 : i32 to index
    %c0_24 = arith.constant 0 : index
    %63 = vector.load %arg7[%62, %c0_24] : memref<296x4xf32, #tpu.memory_space<vmem>>, vector<128x4xf32>
    %c-1_i32_25 = arith.constant -1 : i32
    %64 = vector.broadcast %c-1_i32_25 : i32 to vector<128x1xi32>
    %65 = arith.addi %19, %64 : vector<128x1xi32>
    %c0_i32_26 = arith.constant 0 : i32
    %66 = vector.broadcast %c0_i32_26 : i32 to vector<128x1xi32>
    %67 = arith.cmpi sge, %65, %66 : vector<128x1xi32>
    %c-1_i32_27 = arith.constant -1 : i32
    %68 = vector.broadcast %c-1_i32_27 : i32 to vector<128x1xi32>
    %69 = arith.addi %19, %68 : vector<128x1xi32>
    %c16_i32_28 = arith.constant 16 : i32
    %70 = vector.broadcast %c16_i32_28 : i32 to vector<128x1xi32>
    %71 = arith.cmpi slt, %69, %70 : vector<128x1xi32>
    %72 = arith.andi %67, %71 : vector<128x1xi1>
    %cst_29 = arith.constant 0.000000e+00 : f32
    %73 = vector.shape_cast %72 : vector<128x1xi1> to vector<128x1xi1>
    %74 = vector.broadcast %73 : vector<128x1xi1> to vector<128x4xi1>
    %75 = vector.broadcast %cst_29 : f32 to vector<128x4xf32>
    %76 = arith.select %74, %63, %75 : vector<128x4xi1>, vector<128x4xf32>
    %c16_i32_30 = arith.constant 16 : i32
    %77 = arith.addi %21, %c16_i32_30 : i32
    %c0_i32_31 = arith.constant 0 : i32
    %78 = arith.addi %77, %c0_i32_31 : i32
    %79 = arith.index_cast %78 : i32 to index
    %c0_32 = arith.constant 0 : index
    %80 = vector.load %arg7[%79, %c0_32] : memref<296x4xf32, #tpu.memory_space<vmem>>, vector<128x4xf32>
    %c16_i32_33 = arith.constant 16 : i32
    %81 = arith.addi %21, %c16_i32_33 : i32
    %c1_i32_34 = arith.constant 1 : i32
    %82 = arith.addi %81, %c1_i32_34 : i32
    %83 = arith.index_cast %82 : i32 to index
    %c0_35 = arith.constant 0 : index
    %84 = vector.load %arg7[%83, %c0_35] : memref<296x4xf32, #tpu.memory_space<vmem>>, vector<128x4xf32>
    %c1_i32_36 = arith.constant 1 : i32
    %85 = vector.broadcast %c1_i32_36 : i32 to vector<128x1xi32>
    %86 = arith.addi %19, %85 : vector<128x1xi32>
    %c0_i32_37 = arith.constant 0 : i32
    %87 = vector.broadcast %c0_i32_37 : i32 to vector<128x1xi32>
    %88 = arith.cmpi sge, %86, %87 : vector<128x1xi32>
    %c1_i32_38 = arith.constant 1 : i32
    %89 = vector.broadcast %c1_i32_38 : i32 to vector<128x1xi32>
    %90 = arith.addi %19, %89 : vector<128x1xi32>
    %c16_i32_39 = arith.constant 16 : i32
    %91 = vector.broadcast %c16_i32_39 : i32 to vector<128x1xi32>
    %92 = arith.cmpi slt, %90, %91 : vector<128x1xi32>
    %93 = arith.andi %88, %92 : vector<128x1xi1>
    %cst_40 = arith.constant 0.000000e+00 : f32
    %94 = vector.shape_cast %93 : vector<128x1xi1> to vector<128x1xi1>
    %95 = vector.broadcast %94 : vector<128x1xi1> to vector<128x4xi1>
    %96 = vector.broadcast %cst_40 : f32 to vector<128x4xf32>
    %97 = arith.select %95, %84, %96 : vector<128x4xi1>, vector<128x4xf32>
    %c32_i32 = arith.constant 32 : i32
    %98 = arith.addi %21, %c32_i32 : i32
    %c-1_i32_41 = arith.constant -1 : i32
    %99 = arith.addi %98, %c-1_i32_41 : i32
    %100 = arith.index_cast %99 : i32 to index
    %c0_42 = arith.constant 0 : index
    %101 = vector.load %arg7[%100, %c0_42] : memref<296x4xf32, #tpu.memory_space<vmem>>, vector<128x4xf32>
    %c-1_i32_43 = arith.constant -1 : i32
    %102 = vector.broadcast %c-1_i32_43 : i32 to vector<128x1xi32>
    %103 = arith.addi %19, %102 : vector<128x1xi32>
    %c0_i32_44 = arith.constant 0 : i32
    %104 = vector.broadcast %c0_i32_44 : i32 to vector<128x1xi32>
    %105 = arith.cmpi sge, %103, %104 : vector<128x1xi32>
    %c-1_i32_45 = arith.constant -1 : i32
    %106 = vector.broadcast %c-1_i32_45 : i32 to vector<128x1xi32>
    %107 = arith.addi %19, %106 : vector<128x1xi32>
    %c16_i32_46 = arith.constant 16 : i32
    %108 = vector.broadcast %c16_i32_46 : i32 to vector<128x1xi32>
    %109 = arith.cmpi slt, %107, %108 : vector<128x1xi32>
    %110 = arith.andi %105, %109 : vector<128x1xi1>
    %cst_47 = arith.constant 0.000000e+00 : f32
    %111 = vector.shape_cast %110 : vector<128x1xi1> to vector<128x1xi1>
    %112 = vector.broadcast %111 : vector<128x1xi1> to vector<128x4xi1>
    %113 = vector.broadcast %cst_47 : f32 to vector<128x4xf32>
    %114 = arith.select %112, %101, %113 : vector<128x4xi1>, vector<128x4xf32>
    %c32_i32_48 = arith.constant 32 : i32
    %115 = arith.addi %21, %c32_i32_48 : i32
    %c0_i32_49 = arith.constant 0 : i32
    %116 = arith.addi %115, %c0_i32_49 : i32
    %117 = arith.index_cast %116 : i32 to index
    %c0_50 = arith.constant 0 : index
    %118 = vector.load %arg7[%117, %c0_50] : memref<296x4xf32, #tpu.memory_space<vmem>>, vector<128x4xf32>
    %c32_i32_51 = arith.constant 32 : i32
    %119 = arith.addi %21, %c32_i32_51 : i32
    %c1_i32_52 = arith.constant 1 : i32
    %120 = arith.addi %119, %c1_i32_52 : i32
    %121 = arith.index_cast %120 : i32 to index
    %c0_53 = arith.constant 0 : index
    %122 = vector.load %arg7[%121, %c0_53] : memref<296x4xf32, #tpu.memory_space<vmem>>, vector<128x4xf32>
    %c1_i32_54 = arith.constant 1 : i32
    %123 = vector.broadcast %c1_i32_54 : i32 to vector<128x1xi32>
    %124 = arith.addi %19, %123 : vector<128x1xi32>
    %c0_i32_55 = arith.constant 0 : i32
    %125 = vector.broadcast %c0_i32_55 : i32 to vector<128x1xi32>
    %126 = arith.cmpi sge, %124, %125 : vector<128x1xi32>
    %c1_i32_56 = arith.constant 1 : i32
    %127 = vector.broadcast %c1_i32_56 : i32 to vector<128x1xi32>
    %128 = arith.addi %19, %127 : vector<128x1xi32>
    %c16_i32_57 = arith.constant 16 : i32
    %129 = vector.broadcast %c16_i32_57 : i32 to vector<128x1xi32>
    %130 = arith.cmpi slt, %128, %129 : vector<128x1xi32>
    %131 = arith.andi %126, %130 : vector<128x1xi1>
    %cst_58 = arith.constant 0.000000e+00 : f32
    %132 = vector.shape_cast %131 : vector<128x1xi1> to vector<128x1xi1>
    %133 = vector.broadcast %132 : vector<128x1xi1> to vector<128x4xi1>
    %134 = vector.broadcast %cst_58 : f32 to vector<128x4xf32>
    %135 = arith.select %133, %122, %134 : vector<128x4xi1>, vector<128x4xf32>
    %136 = tpu.concatenate %38, %42, %59, %76, %80, %97, %114, %118, %135 in 1 : vector<128x4xf32>, vector<128x4xf32>, vector<128x4xf32>, vector<128x4xf32>, vector<128x4xf32>, vector<128x4xf32>, vector<128x4xf32>, vector<128x4xf32>, vector<128x4xf32> -> vector<128x36xf32>
    %c0_59 = arith.constant 0 : index
    %c0_60 = arith.constant 0 : index
    %137 = vector.load %arg3[%c0_59, %c0_60] : memref<36x16xf32, #tpu.memory_space<vmem>>, vector<36x16xf32>
    %cst_61 = arith.constant dense<0.000000e+00> : vector<128x16xf32>
    %138 = tpu.matmul %136, %137, %cst_61 {dimension_numbers = #tpu.dot_dimension_numbers<[1], [0], [0], [1], [0, 0, 1, 1], [], []>} : vector<128x36xf32>, vector<36x16xf32>, vector<128x16xf32> -> vector<128x16xf32>
    %c0_62 = arith.constant 0 : index
    %c0_63 = arith.constant 0 : index
    %139 = vector.load %arg4[%c0_62, %c0_63] : memref<1x16xf32, #tpu.memory_space<vmem>>, vector<1x16xf32>
    %140 = vector.shape_cast %139 : vector<1x16xf32> to vector<16xf32>
    %141 = vector.shape_cast %140 : vector<16xf32> to vector<1x16xf32>
    %142 = vector.broadcast %141 : vector<1x16xf32> to vector<128x16xf32>
    %143 = arith.addf %138, %142 : vector<128x16xf32>
    %c0_64 = arith.constant 0 : index
    %c0_65 = arith.constant 0 : index
    %144 = vector.load %arg5[%c0_64, %c0_65] : memref<1x16xf32, #tpu.memory_space<vmem>>, vector<1x16xf32>
    %145 = vector.shape_cast %144 : vector<1x16xf32> to vector<16xf32>
    %cst_66 = arith.constant 0.000000e+00 : f32
    %146 = vector.broadcast %cst_66 : f32 to vector<128x16xf32>
    %147 = arith.cmpf ogt, %143, %146 : vector<128x16xf32>
    %148 = vector.shape_cast %145 : vector<16xf32> to vector<1x16xf32>
    %149 = vector.broadcast %148 : vector<1x16xf32> to vector<128x16xf32>
    %150 = arith.mulf %149, %143 : vector<128x16xf32>
    %151 = arith.select %147, %143, %150 : vector<128x16xi1>, vector<128x16xf32>
    %c0_67 = arith.constant 0 : index
    %c0_68 = arith.constant 0 : index
    %c0_69 = arith.constant 0 : index
    %152 = vector.load %arg6[%c0_67, %c0_68, %c0_69] : memref<1x128x16xf32, #tpu.memory_space<vmem>>, vector<1x128x16xf32>
    %153 = vector.shape_cast %152 : vector<1x128x16xf32> to vector<128x16xf32>
    %154 = vector.shape_cast %151 : vector<128x16xf32> to vector<1x128x16xf32>
    tpu.vector_store %arg6[%c0_67, %c0_68, %c0_69], %154 {strides = array<i32>} : memref<1x128x16xf32, #tpu.memory_space<vmem>>, vector<1x128x16xf32>,
    return
  }
  func.func @transform_0(%arg0: i32, %arg1: i32) -> (i32, i32, i32) {
    %c0_i32 = arith.constant 0 : i32
    %c0_i32_0 = arith.constant 0 : i32
    %c0_i32_1 = arith.constant 0 : i32
    return %arg0, %c0_i32, %c0_i32_0 : i32, i32, i32
  }
  func.func @transform_1(%arg0: i32, %arg1: i32) -> (i32, i32) {
    %c0_i32 = arith.constant 0 : i32
    %c0_i32_0 = arith.constant 0 : i32
    %c0_i32_1 = arith.constant 0 : i32
    return %c0_i32, %c0_i32_0 : i32, i32
  }
  func.func @transform_2(%arg0: i32, %arg1: i32) -> (i32, i32) {
    %c0_i32 = arith.constant 0 : i32
    %c0_i32_0 = arith.constant 0 : i32
    %c0_i32_1 = arith.constant 0 : i32
    return %c0_i32, %c0_i32_0 : i32, i32
  }
  func.func @transform_3(%arg0: i32, %arg1: i32) -> (i32, i32) {
    %c0_i32 = arith.constant 0 : i32
    %c0_i32_0 = arith.constant 0 : i32
    %c0_i32_1 = arith.constant 0 : i32
    return %c0_i32, %c0_i32_0 : i32, i32
  }
  func.func @transform_4(%arg0: i32, %arg1: i32) -> (i32, i32, i32) {
    %c0_i32 = arith.constant 0 : i32
    %c0_i32_0 = arith.constant 0 : i32
    return %arg0, %arg1, %c0_i32 : i32, i32, i32
  }
}

</mosaic_0001>

<llo_original>
// kernel: tpu_custom_call.1
$region0: #{tpu_custom_call.1}
  #allocation0 [shape = 'u32[]', space=smem, size = 0x4, offset = 0x4, fixed_abs, tag = 'smem constant byte address 0x4 - core index']
  #allocation1 [shape = 'u32[72,128]{1,0:T(1,128)}', space=vmem, size = 0x9000, scoped, tag = 'internal scratch']
  #allocation2 [shape = 'f32[296,4]{1,0:T(8,128)}', space=vmem, size = 0x25000, scoped, tag = 'scratch operand']
  %s0 = inlined_call_operand.vmem [shape: f32[2,256,4], index: 0, kind: input, shape index: {}]
  %s1 = inlined_call_operand.vmem [shape: f32[36,16], index: 1, kind: input, shape index: {}]
  %s2 = inlined_call_operand.vmem [shape: f32[1,16], index: 2, kind: input, shape index: {}]
  %s3 = inlined_call_operand.vmem [shape: f32[1,16], index: 3, kind: input, shape index: {}]
  %s4 = inlined_call_operand.vmem [shape: f32[2,256,16], index: 4, kind: output, shape index: {}]
  %s5 = sld [smem:[#allocation0]]
  $region53: #{tpu_custom_call.1} parent=0
    _
  %s7 = ssub.s32 1, %s5
  %s8 = scalar_select 0, %s7, %s5
  loop: start=0, step=1, limit=6
  $region2: #{tpu_custom_call.1} parent=0 // loop_pre_header
    _
  $region3: #{tpu_custom_call.1} parent=0 // loop_header
    %s10 = sphi 0, %s14
    %p11 = scmp.ge.s32.totalorder %s10, 6
    %s17 = sphi 0, %s29
    %s18 = sphi 0, %s25
    %s19 = sphi 0, %s17
    %s20 = sphi 0, %s18
    %s21 = sphi 0, %s19
    %s22 = sphi 0, %s20
    %s32 = sphi 0, %s34
    %s35 = sphi 0, %s32
    %s36 = sphi 0, %s35
    %s52 = sphi 0, %s36
    %s56 = sphi 0, %s56
    %s58 = sphi 0, %s56
    %s59 = sphi 0, %s58
    %s73 = sphi 0, %s59
    %s77 = sphi 0, %s77
    %s79 = sphi 0, %s77
    %s80 = sphi 0, %s79
    %s94 = sphi 0, %s80
    %s98 = sphi 0, %s98
    %s100 = sphi 0, %s98
    %s101 = sphi 0, %s100
    %s115 = sphi 0, %s101
    %s123 = sphi 0, %s125
    %s126 = sphi 0, %s123
    %s127 = sphi 0, %s126
    %s143 = sphi 0, %s127
  $region4: #{tpu_custom_call.1} parent=0 // loop_header_branch
    %13 = sbr.rel (%p11) target = $region8
  $region5: #{tpu_custom_call.1} parent=0 // loop_body
    %s15 = ssub.s32 %s10, 1
    %s16 = ssub.s32 %s10, 2
    %s23 = sadd.s32 1, %s18
    %p24 = scmp.ge.s32.totalorder %s23, 2
    %s25 = scalar_select %p24, 0, %s23
    %s26 = sadd.s32 1, %s17
    %s27 = scalar_select %p24, %s26, %s17
    %p28 = scmp.ge.s32.totalorder %s27, 2
    %s29 = scalar_select %p28, 0, %s27
    %s30 = ssub.s32 %s17, %s29
    %p31 = scmp.eq.s32.totalorder %s30, 0
    %s33 = sadd.s32 %s32, 1
    %s34 = scalar_select %p31, %s32, %s33
    %p37 = pneg %p31
    %p38 = scmp.eq.s32.totalorder %s10, 3
    %p39 = por %p37, %p38
    %p40 = scmp.ne.s32.totalorder %s32, %s35
    %p41 = scmp.eq.s32.totalorder %s10, 0
    %p42 = por %p40, %p41
    %p43 = scmp.ne.s32.totalorder %s32, %s35
    %p44 = scmp.eq.s32.totalorder %s15, 3
    %p45 = por %p43, %p44
    %p46 = scmp.ne.s32.totalorder %s35, %s36
    %p47 = scmp.eq.s32.totalorder %s15, 0
    %p48 = por %p46, %p47
    %p49 = scmp.ne.s32.totalorder %s35, %s36
    %p50 = scmp.eq.s32.totalorder %s16, 3
    %p51 = por %p49, %p50
    %p53 = scmp.ne.s32.totalorder %s36, %s52
    %p54 = scmp.eq.s32.totalorder %s16, 0
    %p55 = por %p53, %p54
    %s57 = sadd.s32 %s56, 1
    %p60 = scmp.eq.s32.totalorder %s10, 3
    %p61 = scmp.ne.s32.totalorder %s56, %s58
    %p62 = scmp.eq.s32.totalorder %s10, 0
    %p63 = por %p61, %p62
    %p64 = scmp.ne.s32.totalorder %s56, %s58
    %p65 = scmp.eq.s32.totalorder %s15, 3
    %p66 = por %p64, %p65
    %p67 = scmp.ne.s32.totalorder %s58, %s59
    %p68 = scmp.eq.s32.totalorder %s15, 0
    %p69 = por %p67, %p68
    %p70 = scmp.ne.s32.totalorder %s58, %s59
    %p71 = scmp.eq.s32.totalorder %s16, 3
    %p72 = por %p70, %p71
    %p74 = scmp.ne.s32.totalorder %s59, %s73
    %p75 = scmp.eq.s32.totalorder %s16, 0
    %p76 = por %p74, %p75
    %s78 = sadd.s32 %s77, 1
    %p81 = scmp.eq.s32.totalorder %s10, 3
    %p82 = scmp.ne.s32.totalorder %s77, %s79
    %p83 = scmp.eq.s32.totalorder %s10, 0
    %p84 = por %p82, %p83
    %p85 = scmp.ne.s32.totalorder %s77, %s79
    %p86 = scmp.eq.s32.totalorder %s15, 3
    %p87 = por %p85, %p86
    %p88 = scmp.ne.s32.totalorder %s79, %s80
    %p89 = scmp.eq.s32.totalorder %s15, 0
    %p90 = por %p88, %p89
    %p91 = scmp.ne.s32.totalorder %s79, %s80
    %p92 = scmp.eq.s32.totalorder %s16, 3
    %p93 = por %p91, %p92
    %p95 = scmp.ne.s32.totalorder %s80, %s94
    %p96 = scmp.eq.s32.totalorder %s16, 0
    %p97 = por %p95, %p96
    %s99 = sadd.s32 %s98, 1
    %p102 = scmp.eq.s32.totalorder %s10, 3
    %p103 = scmp.ne.s32.totalorder %s98, %s100
    %p104 = scmp.eq.s32.totalorder %s10, 0
    %p105 = por %p103, %p104
    %p106 = scmp.ne.s32.totalorder %s98, %s100
    %p107 = scmp.eq.s32.totalorder %s15, 3
    %p108 = por %p106, %p107
    %p109 = scmp.ne.s32.totalorder %s100, %s101
    %p110 = scmp.eq.s32.totalorder %s15, 0
    %p111 = por %p109, %p110
    %p112 = scmp.ne.s32.totalorder %s100, %s101
    %p113 = scmp.eq.s32.totalorder %s16, 3
    %p114 = por %p112, %p113
    %p116 = scmp.ne.s32.totalorder %s101, %s115
    %p117 = scmp.eq.s32.totalorder %s16, 0
    %p118 = por %p116, %p117
    %s119 = ssub.s32 %s17, %s29
    %s120 = ssub.s32 %s18, %s25
    %s121 = sor.u32 %s119, %s120
    %p122 = scmp.eq.s32.totalorder %s121, 0
    %s124 = sadd.s32 %s123, 1
    %s125 = scalar_select %p122, %s123, %s124
    %p128 = pneg %p122
    %p129 = scmp.eq.s32.totalorder %s10, 3
    %p130 = por %p128, %p129
    %p131 = scmp.ne.s32.totalorder %s123, %s126
    %p132 = scmp.eq.s32.totalorder %s10, 0
    %p133 = por %p131, %p132
    %p134 = scmp.ne.s32.totalorder %s123, %s126
    %p135 = scmp.eq.s32.totalorder %s15, 3
    %p136 = por %p134, %p135
    %p137 = scmp.ne.s32.totalorder %s126, %s127
    %p138 = scmp.eq.s32.totalorder %s15, 0
    %p139 = por %p137, %p138
    %p140 = scmp.ne.s32.totalorder %s126, %s127
    %p141 = scmp.eq.s32.totalorder %s16, 3
    %p142 = por %p140, %p141
    %p144 = scmp.ne.s32.totalorder %s127, %s143
    %p145 = scmp.eq.s32.totalorder %s16, 0
    %p146 = por %p144, %p145
    %p147 = scmp.le.s32.totalorder 1, %s10
    %p148 = scmp.lt.s32.totalorder %s10, 5
    %p149 = pnand %p147, %p148
    %p150 = pneg %p149
    // Predicated region
    $region9: #{tpu_custom_call.1} parent=5 // pred_check
      _
    $region10: #{tpu_custom_call.1} parent=5 // pred_check_branch
      %152 = sbr.rel (%p149) target = $region12
    $region11: #{tpu_custom_call.1} parent=5 // pred_region
      %s153 = ssub.s32 %s10, 1
      // Predicated region
      $region13: #{tpu_custom_call.1} parent=11 // pred_check
        %p154 = pneg %p69
      $region14: #{tpu_custom_call.1} parent=11 // pred_check_branch
        %156 = sbr.rel (%p154) target = $region16
      $region15: #{tpu_custom_call.1} parent=11 // pred_region
        _
      $region16: #{tpu_custom_call.1} parent=11 // pred_fallthru
        _
      // Predicated region
      $region17: #{tpu_custom_call.1} parent=11 // pred_check
        %p157 = pneg %p90
      $region18: #{tpu_custom_call.1} parent=11 // pred_check_branch
        %159 = sbr.rel (%p157) target = $region20
      $region19: #{tpu_custom_call.1} parent=11 // pred_region
        _
      $region20: #{tpu_custom_call.1} parent=11 // pred_fallthru
        _
      // Predicated region
      $region21: #{tpu_custom_call.1} parent=11 // pred_check
        %p160 = pneg %p111
      $region22: #{tpu_custom_call.1} parent=11 // pred_check_branch
        %162 = sbr.rel (%p160) target = $region24
      $region23: #{tpu_custom_call.1} parent=11 // pred_region
        _
      $region24: #{tpu_custom_call.1} parent=11 // pred_fallthru
        _
    $region12: #{tpu_custom_call.1} parent=5 // pred_fallthru
      _
    %p163 = scmp.lt.s32.totalorder %s10, 4
    // Predicated region
    $region25: #{tpu_custom_call.1} parent=5 // pred_check
      %p164 = pneg %p163
    $region26: #{tpu_custom_call.1} parent=5 // pred_check_branch
      %166 = sbr.rel (%p164) target = $region28
    $region27: #{tpu_custom_call.1} parent=5 // pred_region
      // Predicated region
      $region29: #{tpu_custom_call.1} parent=27 // pred_check
        %p167 = pneg %p42
      $region30: #{tpu_custom_call.1} parent=27 // pred_check_branch
        %169 = sbr.rel (%p167) target = $region32
      $region31: #{tpu_custom_call.1} parent=27 // pred_region
        %p170 = scmp.lt.s32.totalorder %s17, 1
        %s171 = scalar_select %p170, %s17, 1
        %s172 = smul.addr %s171, 32
        %s173 = smul.addr %s172, 8
        %s174 = scalar_lea.vmem %s0, %s173
      $region32: #{tpu_custom_call.1} parent=27 // pred_fallthru
        _
    $region28: #{tpu_custom_call.1} parent=5 // pred_fallthru
      _
    %p175 = scmp.le.s32.totalorder 1, %s10
    %p176 = scmp.lt.s32.totalorder %s10, 5
    %p177 = pnand %p175, %p176
    %p178 = pneg %p177
    // Predicated region
    $region33: #{tpu_custom_call.1} parent=5 // pred_check
      _
    $region34: #{tpu_custom_call.1} parent=5 // pred_check_branch
      %180 = sbr.rel (%p177) target = $region36
    $region35: #{tpu_custom_call.1} parent=5 // pred_region
      %s181 = ssub.s32 %s10, 1
      %p182 = scmp.lt.s32.totalorder %s19, 1
      %s183 = scalar_select %p182, %s19, 1
      %s184 = smul.addr %s183, 32
      %s185 = smul.addr %s184, 8
      %s186 = scalar_lea.vmem %s0, %s185
      %p187 = pneg %p48
      %p188 = pneg %p45
      %p189 = pneg %p69
      %p190 = pneg %p66
      %p191 = pneg %p90
      %p192 = pneg %p87
      %p193 = pneg %p111
      %p194 = pneg %p108
      %p195 = pneg %p139
      %p196 = pneg %p136
      %s197 = smul.u32 16, %s20
      %p198 = scmp.lt.s32.totalorder %s19, 1
      %s199 = scalar_select %p198, %s19, 1
      %p200 = scmp.lt.s32.totalorder %s197, 31
      %s201 = scalar_select %p200, %s197, 31
      %s202 = smul.addr %s199, 32
      %s203 = sadd.s32 %s201, %s202
      %s204 = smul.addr %s203, 8
      %s205 = scalar_lea.vmem %s4, %s204
      %p206 = scmp.lt.s32.totalorder %s19, 1
      %s207 = scalar_select %p206, %s19, 1
      %s208 = smul.addr %s207, 32
      %s209 = smul.addr %s208, 8
      %s210 = scalar_lea.vmem %s0, %s209
      %s211 = smul.u32 16, %s20
      %p212 = scmp.lt.s32.totalorder %s19, 1
      %s213 = scalar_select %p212, %s19, 1
      %p214 = scmp.lt.s32.totalorder %s211, 31
      %s215 = scalar_select %p214, %s211, 31
      %s216 = smul.addr %s213, 32
      %s217 = sadd.s32 %s215, %s216
      %s218 = smul.addr %s217, 8
      %s219 = scalar_lea.vmem %s4, %s218
      %s220 = smul.u32 16, %s20
      %p221 = scmp.eq.s32.totalorder %s20, 0
      // Predicated region
      $region37: #{tpu_custom_call.1} parent=35 // pred_check
        %p222 = pneg %p221
      $region38: #{tpu_custom_call.1} parent=35 // pred_check_branch
        %224 = sbr.rel (%p222) target = $region40
      $region39: #{tpu_custom_call.1} parent=35 // pred_region
        %vm225 = vcmask 31744
        %226 = vst.msk [vmem:[#allocation2] sm:$0xff] %vm225, 0.0
        %227 = vst.msk [vmem:[#allocation2 + $0x8] sm:$0xff] %vm225, 0.0
        %vm228 = vcmask 24576
        %229 = vst.msk [vmem:[#allocation2 + $0x10] sm:$0x1] %vm228, 0.0
        %230 = vst.msk [vmem:[#allocation2 + $0x111] sm:$0xff] %vm225, 0.0
        %231 = vst.msk [vmem:[#allocation2 + $0x119] sm:$0xff] %vm225, 0.0
        %vm232 = vcmask 30720
        %233 = vst.msk [vmem:[#allocation2 + $0x121] sm:$0x7f] %vm232, 0.0
        %v234 = vld [vmem:[%s210] sm:$0xff]
        %v235 = vld [vmem:[%s210 + $0x8] sm:$0xff]
        %v236 = vld [vmem:[%s210 + $0x10] sm:$0xff]
        %v237 = vld [vmem:[%s210 + $0x18] sm:$0xff]
        %v238 = vld [vmem:[%s210 + $0x20] sm:$0xff]
        %v239 = vld [vmem:[%s210 + $0x28] sm:$0xff]
        %v240 = vld [vmem:[%s210 + $0x30] sm:$0xff]
        %v241 = vld [vmem:[%s210 + $0x38] sm:$0xff]
        %v242 = vld [vmem:[%s210 + $0x40] sm:$0xff]
        %v243 = vld [vmem:[%s210 + $0x48] sm:$0xff]
        %v244 = vld [vmem:[%s210 + $0x50] sm:$0xff]
        %v245 = vld [vmem:[%s210 + $0x58] sm:$0xff]
        %v246 = vld [vmem:[%s210 + $0x60] sm:$0xff]
        %v247 = vld [vmem:[%s210 + $0x68] sm:$0xff]
        %v248 = vld [vmem:[%s210 + $0x70] sm:$0xff]
        %v249 = vld [vmem:[%s210 + $0x78] sm:$0xff]
        %v250 = vld [vmem:[%s210 + $0x80] sm:$0xff]
        %v251 = vld [vmem:[%s210 + $0x88] sm:$0xff]
        %v252 = vld [vmem:[%s210 + $0x90] sm:$0xff]
        %v253 = vld [vmem:[%s210 + $0x98] sm:$0xff]
        %v254 = vld [vmem:[%s210 + $0xa0] sm:$0xff]
        %v255 = vld [vmem:[%s210 + $0xa8] sm:$0xff]
        %v256 = vld [vmem:[%s210 + $0xb0] sm:$0xff]
        %v257 = vld [vmem:[%s210 + $0xb8] sm:$0xff]
        %v258 = vld [vmem:[%s210 + $0xc0] sm:$0xff]
        %v259 = vld [vmem:[%s210 + $0xc8] sm:$0xff]
        %v260 = vld [vmem:[%s210 + $0xd0] sm:$0xff]
        %v261 = vld [vmem:[%s210 + $0xd8] sm:$0xff]
        %v262 = vld [vmem:[%s210 + $0xe0] sm:$0xff]
        %v263 = vld [vmem:[%s210 + $0xe8] sm:$0xff]
        %v264 = vld [vmem:[%s210 + $0xf0] sm:$0xff]
        %v265 = vld [vmem:[%s210 + $0xf8] sm:$0xff]
        %266 = vst.msk [vmem:[#allocation2 + $0x11] sm:$0xff] %vm225, %v234
        %267 = vst.msk [vmem:[#allocation2 + $0x19] sm:$0xff] %vm225, %v235
        %268 = vst.msk [vmem:[#allocation2 + $0x21] sm:$0xff] %vm225, %v236
        %269 = vst.msk [vmem:[#allocation2 + $0x29] sm:$0xff] %vm225, %v237
        %270 = vst.msk [vmem:[#allocation2 + $0x31] sm:$0xff] %vm225, %v238
        %271 = vst.msk [vmem:[#allocation2 + $0x39] sm:$0xff] %vm225, %v239
        %272 = vst.msk [vmem:[#allocation2 + $0x41] sm:$0xff] %vm225, %v240
        %273 = vst.msk [vmem:[#allocation2 + $0x49] sm:$0xff] %vm225, %v241
        %274 = vst.msk [vmem:[#allocation2 + $0x51] sm:$0xff] %vm225, %v242
        %275 = vst.msk [vmem:[#allocation2 + $0x59] sm:$0xff] %vm225, %v243
        %276 = vst.msk [vmem:[#allocation2 + $0x61] sm:$0xff] %vm225, %v244
        %277 = vst.msk [vmem:[#allocation2 + $0x69] sm:$0xff] %vm225, %v245
        %278 = vst.msk [vmem:[#allocation2 + $0x71] sm:$0xff] %vm225, %v246
        %279 = vst.msk [vmem:[#allocation2 + $0x79] sm:$0xff] %vm225, %v247
        %280 = vst.msk [vmem:[#allocation2 + $0x81] sm:$0xff] %vm225, %v248
        %281 = vst.msk [vmem:[#allocation2 + $0x89] sm:$0xff] %vm225, %v249
        %282 = vst.msk [vmem:[#allocation2 + $0x91] sm:$0xff] %vm225, %v250
        %283 = vst.msk [vmem:[#allocation2 + $0x99] sm:$0xff] %vm225, %v251
        %284 = vst.msk [vmem:[#allocation2 + $0xa1] sm:$0xff] %vm225, %v252
        %285 = vst.msk [vmem:[#allocation2 + $0xa9] sm:$0xff] %vm225, %v253
        %286 = vst.msk [vmem:[#allocation2 + $0xb1] sm:$0xff] %vm225, %v254
        %287 = vst.msk [vmem:[#allocation2 + $0xb9] sm:$0xff] %vm225, %v255
        %288 = vst.msk [vmem:[#allocation2 + $0xc1] sm:$0xff] %vm225, %v256
        %289 = vst.msk [vmem:[#allocation2 + $0xc9] sm:$0xff] %vm225, %v257
        %290 = vst.msk [vmem:[#allocation2 + $0xd1] sm:$0xff] %vm225, %v258
        %291 = vst.msk [vmem:[#allocation2 + $0xd9] sm:$0xff] %vm225, %v259
        %292 = vst.msk [vmem:[#allocation2 + $0xe1] sm:$0xff] %vm225, %v260
        %293 = vst.msk [vmem:[#allocation2 + $0xe9] sm:$0xff] %vm225, %v261
        %294 = vst.msk [vmem:[#allocation2 + $0xf1] sm:$0xff] %vm225, %v262
        %295 = vst.msk [vmem:[#allocation2 + $0xf9] sm:$0xff] %vm225, %v263
        %296 = vst.msk [vmem:[#allocation2 + $0x101] sm:$0xff] %vm225, %v264
        %297 = vst.msk [vmem:[#allocation2 + $0x109] sm:$0xff] %vm225, %v265
      $region40: #{tpu_custom_call.1} parent=35 // pred_fallthru
        _
      %v298 = vlaneseq
      %v299 = vshrl.u32 %v298, 7
      %v300 = vadd.s32 %v299, 8
      %v301 = vadd.s32 %v299, 16
      %v302 = vadd.s32 %v299, 24
      %v303 = vadd.s32 %v299, 32
      %v304 = vadd.s32 %v299, 40
      %v305 = vadd.s32 %v299, 48
      %v306 = vadd.s32 %v299, 56
      %v307 = vadd.s32 %v299, 64
      %v308 = vadd.s32 %v299, 72
      %v309 = vadd.s32 %v299, 80
      %v310 = vadd.s32 %v299, 88
      %v311 = vadd.s32 %v299, 96
      %v312 = vadd.s32 %v299, 104
      %v313 = vadd.s32 %v299, 112
      %v314 = vadd.s32 %v299, 120
      %vm315 = vcmp.lt.s32.totalorder %v299, 0
      %v316 = vsub.s32 0, %v299
      %v317 = vsel %vm315, %v316, %v299
      %v318 = vshrl.u32 %v317, 4
      %v319 = vand.u32 %v317, 15
      %v320 = vsub.s32 0, %v319
      %v321 = vsel %vm315, %v320, %v319
      %vm322 = vcmp.lt.s32.totalorder %v300, 0
      %v323 = vsub.s32 0, %v300
      %v324 = vsel %vm322, %v323, %v300
      %v325 = vshrl.u32 %v324, 4
      %v326 = vand.u32 %v324, 15
      %v327 = vsub.s32 0, %v326
      %v328 = vsel %vm322, %v327, %v326
      %vm329 = vcmp.lt.s32.totalorder %v301, 0
      %v330 = vsub.s32 0, %v301
      %v331 = vsel %vm329, %v330, %v301
      %v332 = vshrl.u32 %v331, 4
      %v333 = vand.u32 %v331, 15
      %v334 = vsub.s32 0, %v333
      %v335 = vsel %vm329, %v334, %v333
      %vm336 = vcmp.lt.s32.totalorder %v302, 0
      %v337 = vsub.s32 0, %v302
      %v338 = vsel %vm336, %v337, %v302
      %v339 = vshrl.u32 %v338, 4
      %v340 = vand.u32 %v338, 15
      %v341 = vsub.s32 0, %v340
      %v342 = vsel %vm336, %v341, %v340
      %vm343 = vcmp.lt.s32.totalorder %v303, 0
      %v344 = vsub.s32 0, %v303
      %v345 = vsel %vm343, %v344, %v303
      %v346 = vshrl.u32 %v345, 4
      %v347 = vand.u32 %v345, 15
      %v348 = vsub.s32 0, %v347
      %v349 = vsel %vm343, %v348, %v347
      %vm350 = vcmp.lt.s32.totalorder %v304, 0
      %v351 = vsub.s32 0, %v304
      %v352 = vsel %vm350, %v351, %v304
      %v353 = vshrl.u32 %v352, 4
      %v354 = vand.u32 %v352, 15
      %v355 = vsub.s32 0, %v354
      %v356 = vsel %vm350, %v355, %v354
      %vm357 = vcmp.lt.s32.totalorder %v305, 0
      %v358 = vsub.s32 0, %v305
      %v359 = vsel %vm357, %v358, %v305
      %v360 = vshrl.u32 %v359, 4
      %v361 = vand.u32 %v359, 15
      %v362 = vsub.s32 0, %v361
      %v363 = vsel %vm357, %v362, %v361
      %vm364 = vcmp.lt.s32.totalorder %v306, 0
      %v365 = vsub.s32 0, %v306
      %v366 = vsel %vm364, %v365, %v306
      %v367 = vshrl.u32 %v366, 4
      %v368 = vand.u32 %v366, 15
      %v369 = vsub.s32 0, %v368
      %v370 = vsel %vm364, %v369, %v368
      %vm371 = vcmp.lt.s32.totalorder %v307, 0
      %v372 = vsub.s32 0, %v307
      %v373 = vsel %vm371, %v372, %v307
      %v374 = vshrl.u32 %v373, 4
      %v375 = vand.u32 %v373, 15
      %v376 = vsub.s32 0, %v375
      %v377 = vsel %vm371, %v376, %v375
      %vm378 = vcmp.lt.s32.totalorder %v308, 0
      %v379 = vsub.s32 0, %v308
      %v380 = vsel %vm378, %v379, %v308
      %v381 = vshrl.u32 %v380, 4
      %v382 = vand.u32 %v380, 15
      %v383 = vsub.s32 0, %v382
      %v384 = vsel %vm378, %v383, %v382
      %vm385 = vcmp.lt.s32.totalorder %v309, 0
      %v386 = vsub.s32 0, %v309
      %v387 = vsel %vm385, %v386, %v309
      %v388 = vshrl.u32 %v387, 4
      %v389 = vand.u32 %v387, 15
      %v390 = vsub.s32 0, %v389
      %v391 = vsel %vm385, %v390, %v389
      %vm392 = vcmp.lt.s32.totalorder %v310, 0
      %v393 = vsub.s32 0, %v310
      %v394 = vsel %vm392, %v393, %v310
      %v395 = vshrl.u32 %v394, 4
      %v396 = vand.u32 %v394, 15
      %v397 = vsub.s32 0, %v396
      %v398 = vsel %vm392, %v397, %v396
      %vm399 = vcmp.lt.s32.totalorder %v311, 0
      %v400 = vsub.s32 0, %v311
      %v401 = vsel %vm399, %v400, %v311
      %v402 = vshrl.u32 %v401, 4
      %v403 = vand.u32 %v401, 15
      %v404 = vsub.s32 0, %v403
      %v405 = vsel %vm399, %v404, %v403
      %vm406 = vcmp.lt.s32.totalorder %v312, 0
      %v407 = vsub.s32 0, %v312
      %v408 = vsel %vm406, %v407, %v312
      %v409 = vshrl.u32 %v408, 4
      %v410 = vand.u32 %v408, 15
      %v411 = vsub.s32 0, %v410
      %v412 = vsel %vm406, %v411, %v410
      %vm413 = vcmp.lt.s32.totalorder %v313, 0
      %v414 = vsub.s32 0, %v313
      %v415 = vsel %vm413, %v414, %v313
      %v416 = vshrl.u32 %v415, 4
      %v417 = vand.u32 %v415, 15
      %v418 = vsub.s32 0, %v417
      %v419 = vsel %vm413, %v418, %v417
      %vm420 = vcmp.lt.s32.totalorder %v314, 0
      %v421 = vsub.s32 0, %v314
      %v422 = vsel %vm420, %v421, %v314
      %v423 = vshrl.u32 %v422, 4
      %v424 = vand.u32 %v422, 15
      %v425 = vsub.s32 0, %v424
      %v426 = vsel %vm420, %v425, %v424
      %vm427 = vcmp.ne.s32.totalorder %v321, 0
      %vm428 = vcmp.ne.s32.totalorder %v328, 0
      %vm429 = vcmp.ne.s32.totalorder %v335, 0
      %vm430 = vcmp.ne.s32.totalorder %v342, 0
      %vm431 = vcmp.ne.s32.totalorder %v349, 0
      %vm432 = vcmp.ne.s32.totalorder %v356, 0
      %vm433 = vcmp.ne.s32.totalorder %v363, 0
      %vm434 = vcmp.ne.s32.totalorder %v370, 0
      %vm435 = vcmp.ne.s32.totalorder %v377, 0
      %vm436 = vcmp.ne.s32.totalorder %v384, 0
      %vm437 = vcmp.ne.s32.totalorder %v391, 0
      %vm438 = vcmp.ne.s32.totalorder %v398, 0
      %vm439 = vcmp.ne.s32.totalorder %v405, 0
      %vm440 = vcmp.ne.s32.totalorder %v412, 0
      %vm441 = vcmp.ne.s32.totalorder %v419, 0
      %vm442 = vcmp.ne.s32.totalorder %v426, 0
      %vm443 = vcmp.lt.s32.totalorder %v321, 0
      %vm444 = vcmp.lt.s32.totalorder %v328, 0
      %vm445 = vcmp.lt.s32.totalorder %v335, 0
      %vm446 = vcmp.lt.s32.totalorder %v342, 0
      %vm447 = vcmp.lt.s32.totalorder %v349, 0
      %vm448 = vcmp.lt.s32.totalorder %v356, 0
      %vm449 = vcmp.lt.s32.totalorder %v363, 0
      %vm450 = vcmp.lt.s32.totalorder %v370, 0
      %vm451 = vcmp.lt.s32.totalorder %v377, 0
      %vm452 = vcmp.lt.s32.totalorder %v384, 0
      %vm453 = vcmp.lt.s32.totalorder %v391, 0
      %vm454 = vcmp.lt.s32.totalorder %v398, 0
      %vm455 = vcmp.lt.s32.totalorder %v405, 0
      %vm456 = vcmp.lt.s32.totalorder %v412, 0
      %vm457 = vcmp.lt.s32.totalorder %v419, 0
      %vm458 = vcmp.lt.s32.totalorder %v426, 0
      %vm459 = vmand %vm443, %vm427
      %vm460 = vmand %vm444, %vm428
      %vm461 = vmand %vm445, %vm429
      %vm462 = vmand %vm446, %vm430
      %vm463 = vmand %vm447, %vm431
      %vm464 = vmand %vm448, %vm432
      %vm465 = vmand %vm449, %vm433
      %vm466 = vmand %vm450, %vm434
      %vm467 = vmand %vm451, %vm435
      %vm468 = vmand %vm452, %vm436
      %vm469 = vmand %vm453, %vm437
      %vm470 = vmand %vm454, %vm438
      %vm471 = vmand %vm455, %vm439
      %vm472 = vmand %vm456, %vm440
      %vm473 = vmand %vm457, %vm441
      %vm474 = vmand %vm458, %vm442
      %v475 = vadd.s32 %v321, 16
      %v476 = vadd.s32 %v328, 16
      %v477 = vadd.s32 %v335, 16
      %v478 = vadd.s32 %v342, 16
      %v479 = vadd.s32 %v349, 16
      %v480 = vadd.s32 %v356, 16
      %v481 = vadd.s32 %v363, 16
      %v482 = vadd.s32 %v370, 16
      %v483 = vadd.s32 %v377, 16
      %v484 = vadd.s32 %v384, 16
      %v485 = vadd.s32 %v391, 16
      %v486 = vadd.s32 %v398, 16
      %v487 = vadd.s32 %v405, 16
      %v488 = vadd.s32 %v412, 16
      %v489 = vadd.s32 %v419, 16
      %v490 = vadd.s32 %v426, 16
      %v491 = vsel %vm459, %v475, %v321
      %v492 = vsel %vm460, %v476, %v328
      %v493 = vsel %vm461, %v477, %v335
      %v494 = vsel %vm462, %v478, %v342
      %v495 = vsel %vm463, %v479, %v349
      %v496 = vsel %vm464, %v480, %v356
      %v497 = vsel %vm465, %v481, %v363
      %v498 = vsel %vm466, %v482, %v370
      %v499 = vsel %vm467, %v483, %v377
      %v500 = vsel %vm468, %v484, %v384
      %v501 = vsel %vm469, %v485, %v391
      %v502 = vsel %vm470, %v486, %v398
      %v503 = vsel %vm471, %v487, %v405
      %v504 = vsel %vm472, %v488, %v412
      %v505 = vsel %vm473, %v489, %v419
      %v506 = vsel %vm474, %v490, %v426
      %s507 = smul.u32 %s20, 128
      %s508 = sadd.s32 %s507, 1
      %s509 = scalar_lea.vmem [#allocation2], %s507
      %v510 = vld [vmem:[%s509] sm:$0xff]
      %v511 = vld [vmem:[%s509 + $0x8] sm:$0xff]
      %v512 = vld [vmem:[%s509 + $0x10] sm:$0xff]
      %v513 = vld [vmem:[%s509 + $0x18] sm:$0xff]
      %v514 = vld [vmem:[%s509 + $0x20] sm:$0xff]
      %v515 = vld [vmem:[%s509 + $0x28] sm:$0xff]
      %v516 = vld [vmem:[%s509 + $0x30] sm:$0xff]
      %v517 = vld [vmem:[%s509 + $0x38] sm:$0xff]
      %v518 = vld [vmem:[%s509 + $0x40] sm:$0xff]
      %v519 = vld [vmem:[%s509 + $0x48] sm:$0xff]
      %v520 = vld [vmem:[%s509 + $0x50] sm:$0xff]
      %v521 = vld [vmem:[%s509 + $0x58] sm:$0xff]
      %v522 = vld [vmem:[%s509 + $0x60] sm:$0xff]
      %v523 = vld [vmem:[%s509 + $0x68] sm:$0xff]
      %v524 = vld [vmem:[%s509 + $0x70] sm:$0xff]
      %v525 = vld [vmem:[%s509 + $0x78] sm:$0xff]
      %v526 = vadd.s32 %v491, 4294967295
      %v527 = vadd.s32 %v492, 4294967295
      %v528 = vadd.s32 %v493, 4294967295
      %v529 = vadd.s32 %v494, 4294967295
      %v530 = vadd.s32 %v495, 4294967295
      %v531 = vadd.s32 %v496, 4294967295
      %v532 = vadd.s32 %v497, 4294967295
      %v533 = vadd.s32 %v498, 4294967295
      %v534 = vadd.s32 %v499, 4294967295
      %v535 = vadd.s32 %v500, 4294967295
      %v536 = vadd.s32 %v501, 4294967295
      %v537 = vadd.s32 %v502, 4294967295
      %v538 = vadd.s32 %v503, 4294967295
      %v539 = vadd.s32 %v504, 4294967295
      %v540 = vadd.s32 %v505, 4294967295
      %v541 = vadd.s32 %v506, 4294967295
      %vm542 = vcmp.ge.s32.totalorder %v526, 0
      %vm543 = vcmp.ge.s32.totalorder %v527, 0
      %vm544 = vcmp.ge.s32.totalorder %v528, 0
      %vm545 = vcmp.ge.s32.totalorder %v529, 0
      %vm546 = vcmp.ge.s32.totalorder %v530, 0
      %vm547 = vcmp.ge.s32.totalorder %v531, 0
      %vm548 = vcmp.ge.s32.totalorder %v532, 0
      %vm549 = vcmp.ge.s32.totalorder %v533, 0
      %vm550 = vcmp.ge.s32.totalorder %v534, 0
      %vm551 = vcmp.ge.s32.totalorder %v535, 0
      %vm552 = vcmp.ge.s32.totalorder %v536, 0
      %vm553 = vcmp.ge.s32.totalorder %v537, 0
      %vm554 = vcmp.ge.s32.totalorder %v538, 0
      %vm555 = vcmp.ge.s32.totalorder %v539, 0
      %vm556 = vcmp.ge.s32.totalorder %v540, 0
      %vm557 = vcmp.ge.s32.totalorder %v541, 0
      %vm558 = vcmp.lt.s32.totalorder %v526, 16
      %vm559 = vcmp.lt.s32.totalorder %v527, 16
      %vm560 = vcmp.lt.s32.totalorder %v528, 16
      %vm561 = vcmp.lt.s32.totalorder %v529, 16
      %vm562 = vcmp.lt.s32.totalorder %v530, 16
      %vm563 = vcmp.lt.s32.totalorder %v531, 16
      %vm564 = vcmp.lt.s32.totalorder %v532, 16
      %vm565 = vcmp.lt.s32.totalorder %v533, 16
      %vm566 = vcmp.lt.s32.totalorder %v534, 16
      %vm567 = vcmp.lt.s32.totalorder %v535, 16
      %vm568 = vcmp.lt.s32.totalorder %v536, 16
      %vm569 = vcmp.lt.s32.totalorder %v537, 16
      %vm570 = vcmp.lt.s32.totalorder %v538, 16
      %vm571 = vcmp.lt.s32.totalorder %v539, 16
      %vm572 = vcmp.lt.s32.totalorder %v540, 16
      %vm573 = vcmp.lt.s32.totalorder %v541, 16
      %vm574 = vmand %vm542, %vm558
      %vm575 = vmand %vm543, %vm559
      %vm576 = vmand %vm544, %vm560
      %vm577 = vmand %vm545, %vm561
      %vm578 = vmand %vm546, %vm562
      %vm579 = vmand %vm547, %vm563
      %vm580 = vmand %vm548, %vm564
      %vm581 = vmand %vm549, %vm565
      %vm582 = vmand %vm550, %vm566
      %vm583 = vmand %vm551, %vm567
      %vm584 = vmand %vm552, %vm568
      %vm585 = vmand %vm553, %vm569
      %vm586 = vmand %vm554, %vm570
      %vm587 = vmand %vm555, %vm571
      %vm588 = vmand %vm556, %vm572
      %vm589 = vmand %vm557, %vm573
      %v590 = vsel %vm574, 1, 0
      %v591 = vsel %vm575, 1, 0
      %v592 = vsel %vm576, 1, 0
      %v593 = vsel %vm577, 1, 0
      %v594 = vsel %vm578, 1, 0
      %v595 = vsel %vm579, 1, 0
      %v596 = vsel %vm580, 1, 0
      %v597 = vsel %vm581, 1, 0
      %v598 = vsel %vm582, 1, 0
      %v599 = vsel %vm583, 1, 0
      %v600 = vsel %vm584, 1, 0
      %v601 = vsel %vm585, 1, 0
      %v602 = vsel %vm586, 1, 0
      %v603 = vsel %vm587, 1, 0
      %v604 = vsel %vm588, 1, 0
      %v605 = vsel %vm589, 1, 0
      %vm606 = vcmp.eq.s32.totalorder %v590, 1
      %vm607 = vcmp.eq.s32.totalorder %v591, 1
      %vm608 = vcmp.eq.s32.totalorder %v592, 1
      %vm609 = vcmp.eq.s32.totalorder %v593, 1
      %vm610 = vcmp.eq.s32.totalorder %v594, 1
      %vm611 = vcmp.eq.s32.totalorder %v595, 1
      %vm612 = vcmp.eq.s32.totalorder %v596, 1
      %vm613 = vcmp.eq.s32.totalorder %v597, 1
      %vm614 = vcmp.eq.s32.totalorder %v598, 1
      %vm615 = vcmp.eq.s32.totalorder %v599, 1
      %vm616 = vcmp.eq.s32.totalorder %v600, 1
      %vm617 = vcmp.eq.s32.totalorder %v601, 1
      %vm618 = vcmp.eq.s32.totalorder %v602, 1
      %vm619 = vcmp.eq.s32.totalorder %v603, 1
      %vm620 = vcmp.eq.s32.totalorder %v604, 1
      %vm621 = vcmp.eq.s32.totalorder %v605, 1
      %v622 = vsel %vm606, %v510, 0.0
      %v623 = vsel %vm607, %v511, 0.0
      %v624 = vsel %vm608, %v512, 0.0
      %v625 = vsel %vm609, %v513, 0.0
      %v626 = vsel %vm610, %v514, 0.0
      %v627 = vsel %vm611, %v515, 0.0
      %v628 = vsel %vm612, %v516, 0.0
      %v629 = vsel %vm613, %v517, 0.0
      %v630 = vsel %vm614, %v518, 0.0
      %v631 = vsel %vm615, %v519, 0.0
      %v632 = vsel %vm616, %v520, 0.0
      %v633 = vsel %vm617, %v521, 0.0
      %v634 = vsel %vm618, %v522, 0.0
      %v635 = vsel %vm619, %v523, 0.0
      %v636 = vsel %vm620, %v524, 0.0
      %v637 = vsel %vm621, %v525, 0.0
      %s638 = scalar_lea.vmem [#allocation2], %s508
      %v639 = vld [vmem:[%s638] sm:$0xff]
      %v640 = vld [vmem:[%s638 + $0x8] sm:$0xff]
      %v641 = vld [vmem:[%s638 + $0x10] sm:$0xff]
      %v642 = vld [vmem:[%s638 + $0x18] sm:$0xff]
      %v643 = vld [vmem:[%s638 + $0x20] sm:$0xff]
      %v644 = vld [vmem:[%s638 + $0x28] sm:$0xff]
      %v645 = vld [vmem:[%s638 + $0x30] sm:$0xff]
      %v646 = vld [vmem:[%s638 + $0x38] sm:$0xff]
      %v647 = vld [vmem:[%s638 + $0x40] sm:$0xff]
      %v648 = vld [vmem:[%s638 + $0x48] sm:$0xff]
      %v649 = vld [vmem:[%s638 + $0x50] sm:$0xff]
      %v650 = vld [vmem:[%s638 + $0x58] sm:$0xff]
      %v651 = vld [vmem:[%s638 + $0x60] sm:$0xff]
      %v652 = vld [vmem:[%s638 + $0x68] sm:$0xff]
      %v653 = vld [vmem:[%s638 + $0x70] sm:$0xff]
      %v654 = vld [vmem:[%s638 + $0x78] sm:$0xff]
      %s655 = sadd.s32 %s507, 2
      %s656 = scalar_lea.vmem [#allocation2], %s655
      %v657 = vld [vmem:[%s656] sm:$0xff]
      %v658 = vld [vmem:[%s656 + $0x8] sm:$0xff]
      %v659 = vld [vmem:[%s656 + $0x10] sm:$0xff]
      %v660 = vld [vmem:[%s656 + $0x18] sm:$0xff]
      %v661 = vld [vmem:[%s656 + $0x20] sm:$0xff]
      %v662 = vld [vmem:[%s656 + $0x28] sm:$0xff]
      %v663 = vld [vmem:[%s656 + $0x30] sm:$0xff]
      %v664 = vld [vmem:[%s656 + $0x38] sm:$0xff]
      %v665 = vld [vmem:[%s656 + $0x40] sm:$0xff]
      %v666 = vld [vmem:[%s656 + $0x48] sm:$0xff]
      %v667 = vld [vmem:[%s656 + $0x50] sm:$0xff]
      %v668 = vld [vmem:[%s656 + $0x58] sm:$0xff]
      %v669 = vld [vmem:[%s656 + $0x60] sm:$0xff]
      %v670 = vld [vmem:[%s656 + $0x68] sm:$0xff]
      %v671 = vld [vmem:[%s656 + $0x70] sm:$0xff]
      %v672 = vld [vmem:[%s656 + $0x78] sm:$0xff]
      %v673 = vadd.s32 %v491, 1
      %v674 = vadd.s32 %v492, 1
      %v675 = vadd.s32 %v493, 1
      %v676 = vadd.s32 %v494, 1
      %v677 = vadd.s32 %v495, 1
      %v678 = vadd.s32 %v496, 1
      %v679 = vadd.s32 %v497, 1
      %v680 = vadd.s32 %v498, 1
      %v681 = vadd.s32 %v499, 1
      %v682 = vadd.s32 %v500, 1
      %v683 = vadd.s32 %v501, 1
      %v684 = vadd.s32 %v502, 1
      %v685 = vadd.s32 %v503, 1
      %v686 = vadd.s32 %v504, 1
      %v687 = vadd.s32 %v505, 1
      %v688 = vadd.s32 %v506, 1
      %vm689 = vcmp.ge.s32.totalorder %v673, 0
      %vm690 = vcmp.ge.s32.totalorder %v674, 0
      %vm691 = vcmp.ge.s32.totalorder %v675, 0
      %vm692 = vcmp.ge.s32.totalorder %v676, 0
      %vm693 = vcmp.ge.s32.totalorder %v677, 0
      %vm694 = vcmp.ge.s32.totalorder %v678, 0
      %vm695 = vcmp.ge.s32.totalorder %v679, 0
      %vm696 = vcmp.ge.s32.totalorder %v680, 0
      %vm697 = vcmp.ge.s32.totalorder %v681, 0
      %vm698 = vcmp.ge.s32.totalorder %v682, 0
      %vm699 = vcmp.ge.s32.totalorder %v683, 0
      %vm700 = vcmp.ge.s32.totalorder %v684, 0
      %vm701 = vcmp.ge.s32.totalorder %v685, 0
      %vm702 = vcmp.ge.s32.totalorder %v686, 0
      %vm703 = vcmp.ge.s32.totalorder %v687, 0
      %vm704 = vcmp.ge.s32.totalorder %v688, 0
      %vm705 = vcmp.lt.s32.totalorder %v673, 16
      %vm706 = vcmp.lt.s32.totalorder %v674, 16
      %vm707 = vcmp.lt.s32.totalorder %v675, 16
      %vm708 = vcmp.lt.s32.totalorder %v676, 16
      %vm709 = vcmp.lt.s32.totalorder %v677, 16
      %vm710 = vcmp.lt.s32.totalorder %v678, 16
      %vm711 = vcmp.lt.s32.totalorder %v679, 16
      %vm712 = vcmp.lt.s32.totalorder %v680, 16
      %vm713 = vcmp.lt.s32.totalorder %v681, 16
      %vm714 = vcmp.lt.s32.totalorder %v682, 16
      %vm715 = vcmp.lt.s32.totalorder %v683, 16
      %vm716 = vcmp.lt.s32.totalorder %v684, 16
      %vm717 = vcmp.lt.s32.totalorder %v685, 16
      %vm718 = vcmp.lt.s32.totalorder %v686, 16
      %vm719 = vcmp.lt.s32.totalorder %v687, 16
      %vm720 = vcmp.lt.s32.totalorder %v688, 16
      %vm721 = vmand %vm689, %vm705
      %vm722 = vmand %vm690, %vm706
      %vm723 = vmand %vm691, %vm707
      %vm724 = vmand %vm692, %vm708
      %vm725 = vmand %vm693, %vm709
      %vm726 = vmand %vm694, %vm710
      %vm727 = vmand %vm695, %vm711
      %vm728 = vmand %vm696, %vm712
      %vm729 = vmand %vm697, %vm713
      %vm730 = vmand %vm698, %vm714
      %vm731 = vmand %vm699, %vm715
      %vm732 = vmand %vm700, %vm716
      %vm733 = vmand %vm701, %vm717
      %vm734 = vmand %vm702, %vm718
      %vm735 = vmand %vm703, %vm719
      %vm736 = vmand %vm704, %vm720
      %v737 = vsel %vm721, 1, 0
      %v738 = vsel %vm722, 1, 0
      %v739 = vsel %vm723, 1, 0
      %v740 = vsel %vm724, 1, 0
      %v741 = vsel %vm725, 1, 0
      %v742 = vsel %vm726, 1, 0
      %v743 = vsel %vm727, 1, 0
      %v744 = vsel %vm728, 1, 0
      %v745 = vsel %vm729, 1, 0
      %v746 = vsel %vm730, 1, 0
      %v747 = vsel %vm731, 1, 0
      %v748 = vsel %vm732, 1, 0
      %v749 = vsel %vm733, 1, 0
      %v750 = vsel %vm734, 1, 0
      %v751 = vsel %vm735, 1, 0
      %v752 = vsel %vm736, 1, 0
      %vm753 = vcmp.eq.s32.totalorder %v737, 1
      %vm754 = vcmp.eq.s32.totalorder %v738, 1
      %vm755 = vcmp.eq.s32.totalorder %v739, 1
      %vm756 = vcmp.eq.s32.totalorder %v740, 1
      %vm757 = vcmp.eq.s32.totalorder %v741, 1
      %vm758 = vcmp.eq.s32.totalorder %v742, 1
      %vm759 = vcmp.eq.s32.totalorder %v743, 1
      %vm760 = vcmp.eq.s32.totalorder %v744, 1
      %vm761 = vcmp.eq.s32.totalorder %v745, 1
      %vm762 = vcmp.eq.s32.totalorder %v746, 1
      %vm763 = vcmp.eq.s32.totalorder %v747, 1
      %vm764 = vcmp.eq.s32.totalorder %v748, 1
      %vm765 = vcmp.eq.s32.totalorder %v749, 1
      %vm766 = vcmp.eq.s32.totalorder %v750, 1
      %vm767 = vcmp.eq.s32.totalorder %v751, 1
      %vm768 = vcmp.eq.s32.totalorder %v752, 1
      %v769 = vsel %vm753, %v657, 0.0
      %v770 = vsel %vm754, %v658, 0.0
      %v771 = vsel %vm755, %v659, 0.0
      %v772 = vsel %vm756, %v660, 0.0
      %v773 = vsel %vm757, %v661, 0.0
      %v774 = vsel %vm758, %v662, 0.0
      %v775 = vsel %vm759, %v663, 0.0
      %v776 = vsel %vm760, %v664, 0.0
      %v777 = vsel %vm761, %v665, 0.0
      %v778 = vsel %vm762, %v666, 0.0
      %v779 = vsel %vm763, %v667, 0.0
      %v780 = vsel %vm764, %v668, 0.0
      %v781 = vsel %vm765, %v669, 0.0
      %v782 = vsel %vm766, %v670, 0.0
      %v783 = vsel %vm767, %v671, 0.0
      %v784 = vsel %vm768, %v672, 0.0
      %s785 = sadd.s32 %s507, 16
      %s786 = scalar_lea.vmem [#allocation2], %s785
      %v787 = vld [vmem:[%s786] sm:$0xff]
      %v788 = vld [vmem:[%s786 + $0x8] sm:$0xff]
      %v789 = vld [vmem:[%s786 + $0x10] sm:$0xff]
      %v790 = vld [vmem:[%s786 + $0x18] sm:$0xff]
      %v791 = vld [vmem:[%s786 + $0x20] sm:$0xff]
      %v792 = vld [vmem:[%s786 + $0x28] sm:$0xff]
      %v793 = vld [vmem:[%s786 + $0x30] sm:$0xff]
      %v794 = vld [vmem:[%s786 + $0x38] sm:$0xff]
      %v795 = vld [vmem:[%s786 + $0x40] sm:$0xff]
      %v796 = vld [vmem:[%s786 + $0x48] sm:$0xff]
      %v797 = vld [vmem:[%s786 + $0x50] sm:$0xff]
      %v798 = vld [vmem:[%s786 + $0x58] sm:$0xff]
      %v799 = vld [vmem:[%s786 + $0x60] sm:$0xff]
      %v800 = vld [vmem:[%s786 + $0x68] sm:$0xff]
      %v801 = vld [vmem:[%s786 + $0x70] sm:$0xff]
      %v802 = vld [vmem:[%s786 + $0x78] sm:$0xff]
      %v803 = vsel %vm606, %v787, 0.0
      %v804 = vsel %vm607, %v788, 0.0
      %v805 = vsel %vm608, %v789, 0.0
      %v806 = vsel %vm609, %v790, 0.0
      %v807 = vsel %vm610, %v791, 0.0
      %v808 = vsel %vm611, %v792, 0.0
      %v809 = vsel %vm612, %v793, 0.0
      %v810 = vsel %vm613, %v794, 0.0
      %v811 = vsel %vm614, %v795, 0.0
      %v812 = vsel %vm615, %v796, 0.0
      %v813 = vsel %vm616, %v797, 0.0
      %v814 = vsel %vm617, %v798, 0.0
      %v815 = vsel %vm618, %v799, 0.0
      %v816 = vsel %vm619, %v800, 0.0
      %v817 = vsel %vm620, %v801, 0.0
      %v818 = vsel %vm621, %v802, 0.0
      %s819 = sadd.s32 %s507, 17
      %s820 = scalar_lea.vmem [#allocation2], %s819
      %v821 = vld [vmem:[%s820] sm:$0xff]
      %v822 = vld [vmem:[%s820 + $0x8] sm:$0xff]
      %v823 = vld [vmem:[%s820 + $0x10] sm:$0xff]
      %v824 = vld [vmem:[%s820 + $0x18] sm:$0xff]
      %v825 = vld [vmem:[%s820 + $0x20] sm:$0xff]
      %v826 = vld [vmem:[%s820 + $0x28] sm:$0xff]
      %v827 = vld [vmem:[%s820 + $0x30] sm:$0xff]
      %v828 = vld [vmem:[%s820 + $0x38] sm:$0xff]
      %v829 = vld [vmem:[%s820 + $0x40] sm:$0xff]
      %v830 = vld [vmem:[%s820 + $0x48] sm:$0xff]
      %v831 = vld [vmem:[%s820 + $0x50] sm:$0xff]
      %v832 = vld [vmem:[%s820 + $0x58] sm:$0xff]
      %v833 = vld [vmem:[%s820 + $0x60] sm:$0xff]
      %v834 = vld [vmem:[%s820 + $0x68] sm:$0xff]
      %v835 = vld [vmem:[%s820 + $0x70] sm:$0xff]
      %v836 = vld [vmem:[%s820 + $0x78] sm:$0xff]
      %s837 = sadd.s32 %s507, 18
      %s838 = scalar_lea.vmem [#allocation2], %s837
      %v839 = vld [vmem:[%s838] sm:$0xff]
      %v840 = vld [vmem:[%s838 + $0x8] sm:$0xff]
      %v841 = vld [vmem:[%s838 + $0x10] sm:$0xff]
      %v842 = vld [vmem:[%s838 + $0x18] sm:$0xff]
      %v843 = vld [vmem:[%s838 + $0x20] sm:$0xff]
      %v844 = vld [vmem:[%s838 + $0x28] sm:$0xff]
      %v845 = vld [vmem:[%s838 + $0x30] sm:$0xff]
      %v846 = vld [vmem:[%s838 + $0x38] sm:$0xff]
      %v847 = vld [vmem:[%s838 + $0x40] sm:$0xff]
      %v848 = vld [vmem:[%s838 + $0x48] sm:$0xff]
      %v849 = vld [vmem:[%s838 + $0x50] sm:$0xff]
      %v850 = vld [vmem:[%s838 + $0x58] sm:$0xff]
      %v851 = vld [vmem:[%s838 + $0x60] sm:$0xff]
      %v852 = vld [vmem:[%s838 + $0x68] sm:$0xff]
      %v853 = vld [vmem:[%s838 + $0x70] sm:$0xff]
      %v854 = vld [vmem:[%s838 + $0x78] sm:$0xff]
      %v855 = vsel %vm753, %v839, 0.0
      %v856 = vsel %vm754, %v840, 0.0
      %v857 = vsel %vm755, %v841, 0.0
      %v858 = vsel %vm756, %v842, 0.0
      %v859 = vsel %vm757, %v843, 0.0
      %v860 = vsel %vm758, %v844, 0.0
      %v861 = vsel %vm759, %v845, 0.0
      %v862 = vsel %vm760, %v846, 0.0
      %v863 = vsel %vm761, %v847, 0.0
      %v864 = vsel %vm762, %v848, 0.0
      %v865 = vsel %vm763, %v849, 0.0
      %v866 = vsel %vm764, %v850, 0.0
      %v867 = vsel %vm765, %v851, 0.0
      %v868 = vsel %vm766, %v852, 0.0
      %v869 = vsel %vm767, %v853, 0.0
      %v870 = vsel %vm768, %v854, 0.0
      %s871 = sadd.s32 %s507, 32
      %s872 = scalar_lea.vmem [#allocation2], %s871
      %v873 = vld [vmem:[%s872] sm:$0xff]
      %v874 = vld [vmem:[%s872 + $0x8] sm:$0xff]
      %v875 = vld [vmem:[%s872 + $0x10] sm:$0xff]
      %v876 = vld [vmem:[%s872 + $0x18] sm:$0xff]
      %v877 = vld [vmem:[%s872 + $0x20] sm:$0xff]
      %v878 = vld [vmem:[%s872 + $0x28] sm:$0xff]
      %v879 = vld [vmem:[%s872 + $0x30] sm:$0xff]
      %v880 = vld [vmem:[%s872 + $0x38] sm:$0xff]
      %v881 = vld [vmem:[%s872 + $0x40] sm:$0xff]
      %v882 = vld [vmem:[%s872 + $0x48] sm:$0xff]
      %v883 = vld [vmem:[%s872 + $0x50] sm:$0xff]
      %v884 = vld [vmem:[%s872 + $0x58] sm:$0xff]
      %v885 = vld [vmem:[%s872 + $0x60] sm:$0xff]
      %v886 = vld [vmem:[%s872 + $0x68] sm:$0xff]
      %v887 = vld [vmem:[%s872 + $0x70] sm:$0xff]
      %v888 = vld [vmem:[%s872 + $0x78] sm:$0xff]
      %v889 = vsel %vm606, %v873, 0.0
      %v890 = vsel %vm607, %v874, 0.0
      %v891 = vsel %vm608, %v875, 0.0
      %v892 = vsel %vm609, %v876, 0.0
      %v893 = vsel %vm610, %v877, 0.0
      %v894 = vsel %vm611, %v878, 0.0
      %v895 = vsel %vm612, %v879, 0.0
      %v896 = vsel %vm613, %v880, 0.0
      %v897 = vsel %vm614, %v881, 0.0
      %v898 = vsel %vm615, %v882, 0.0
      %v899 = vsel %vm616, %v883, 0.0
      %v900 = vsel %vm617, %v884, 0.0
      %v901 = vsel %vm618, %v885, 0.0
      %v902 = vsel %vm619, %v886, 0.0
      %v903 = vsel %vm620, %v887, 0.0
      %v904 = vsel %vm621, %v888, 0.0
      %s905 = sadd.s32 %s507, 33
      %s906 = scalar_lea.vmem [#allocation2], %s905
      %v907 = vld [vmem:[%s906] sm:$0xff]
      %v908 = vld [vmem:[%s906 + $0x8] sm:$0xff]
      %v909 = vld [vmem:[%s906 + $0x10] sm:$0xff]
      %v910 = vld [vmem:[%s906 + $0x18] sm:$0xff]
      %v911 = vld [vmem:[%s906 + $0x20] sm:$0xff]
      %v912 = vld [vmem:[%s906 + $0x28] sm:$0xff]
      %v913 = vld [vmem:[%s906 + $0x30] sm:$0xff]
      %v914 = vld [vmem:[%s906 + $0x38] sm:$0xff]
      %v915 = vld [vmem:[%s906 + $0x40] sm:$0xff]
      %v916 = vld [vmem:[%s906 + $0x48] sm:$0xff]
      %v917 = vld [vmem:[%s906 + $0x50] sm:$0xff]
      %v918 = vld [vmem:[%s906 + $0x58] sm:$0xff]
      %v919 = vld [vmem:[%s906 + $0x60] sm:$0xff]
      %v920 = vld [vmem:[%s906 + $0x68] sm:$0xff]
      %v921 = vld [vmem:[%s906 + $0x70] sm:$0xff]
      %v922 = vld [vmem:[%s906 + $0x78] sm:$0xff]
      %s923 = sadd.s32 %s507, 34
      %s924 = scalar_lea.vmem [#allocation2], %s923
      %v925 = vld [vmem:[%s924] sm:$0xff]
      %v926 = vld [vmem:[%s924 + $0x8] sm:$0xff]
      %v927 = vld [vmem:[%s924 + $0x10] sm:$0xff]
      %v928 = vld [vmem:[%s924 + $0x18] sm:$0xff]
      %v929 = vld [vmem:[%s924 + $0x20] sm:$0xff]
      %v930 = vld [vmem:[%s924 + $0x28] sm:$0xff]
      %v931 = vld [vmem:[%s924 + $0x30] sm:$0xff]
      %v932 = vld [vmem:[%s924 + $0x38] sm:$0xff]
      %v933 = vld [vmem:[%s924 + $0x40] sm:$0xff]
      %v934 = vld [vmem:[%s924 + $0x48] sm:$0xff]
      %v935 = vld [vmem:[%s924 + $0x50] sm:$0xff]
      %v936 = vld [vmem:[%s924 + $0x58] sm:$0xff]
      %v937 = vld [vmem:[%s924 + $0x60] sm:$0xff]
      %v938 = vld [vmem:[%s924 + $0x68] sm:$0xff]
      %v939 = vld [vmem:[%s924 + $0x70] sm:$0xff]
      %v940 = vld [vmem:[%s924 + $0x78] sm:$0xff]
      %v941 = vsel %vm753, %v925, 0.0
      %v942 = vsel %vm754, %v926, 0.0
      %v943 = vsel %vm755, %v927, 0.0
      %v944 = vsel %vm756, %v928, 0.0
      %v945 = vsel %vm757, %v929, 0.0
      %v946 = vsel %vm758, %v930, 0.0
      %v947 = vsel %vm759, %v931, 0.0
      %v948 = vsel %vm760, %v932, 0.0
      %v949 = vsel %vm761, %v933, 0.0
      %v950 = vsel %vm762, %v934, 0.0
      %v951 = vsel %vm763, %v935, 0.0
      %v952 = vsel %vm764, %v936, 0.0
      %v953 = vsel %vm765, %v937, 0.0
      %v954 = vsel %vm766, %v938, 0.0
      %v955 = vsel %vm767, %v939, 0.0
      %v956 = vsel %vm768, %v940, 0.0
      %973 = vrot.lane.b32.xlu0 %v639, 4
      %v974 = vpop.permute.xlu0 %973
      %975 = vrot.lane.b32.xlu0 %v640, 4
      %v976 = vpop.permute.xlu0 %975
      %977 = vrot.lane.b32.xlu0 %v641, 4
      %v978 = vpop.permute.xlu0 %977
      %979 = vrot.lane.b32.xlu0 %v642, 4
      %v980 = vpop.permute.xlu0 %979
      %981 = vrot.lane.b32.xlu0 %v643, 4
      %v982 = vpop.permute.xlu0 %981
      %983 = vrot.lane.b32.xlu0 %v644, 4
      %v984 = vpop.permute.xlu0 %983
      %985 = vrot.lane.b32.xlu0 %v645, 4
      %v986 = vpop.permute.xlu0 %985
      %987 = vrot.lane.b32.xlu0 %v646, 4
      %v988 = vpop.permute.xlu0 %987
      %989 = vrot.lane.b32.xlu0 %v647, 4
      %v990 = vpop.permute.xlu0 %989
      %991 = vrot.lane.b32.xlu0 %v648, 4
      %v992 = vpop.permute.xlu0 %991
      %993 = vrot.lane.b32.xlu0 %v649, 4
      %v994 = vpop.permute.xlu0 %993
      %995 = vrot.lane.b32.xlu0 %v650, 4
      %v996 = vpop.permute.xlu0 %995
      %997 = vrot.lane.b32.xlu0 %v651, 4
      %v998 = vpop.permute.xlu0 %997
      %999 = vrot.lane.b32.xlu0 %v652, 4
      %v1000 = vpop.permute.xlu0 %999
      %1001 = vrot.lane.b32.xlu0 %v653, 4
      %v1002 = vpop.permute.xlu0 %1001
      %1003 = vrot.lane.b32.xlu0 %v654, 4
      %v1004 = vpop.permute.xlu0 %1003
      %1037 = vrot.lane.b32.xlu0 %v769, 8
      %v1038 = vpop.permute.xlu0 %1037
      %1039 = vrot.lane.b32.xlu0 %v770, 8
      %v1040 = vpop.permute.xlu0 %1039
      %1041 = vrot.lane.b32.xlu0 %v771, 8
      %v1042 = vpop.permute.xlu0 %1041
      %1043 = vrot.lane.b32.xlu0 %v772, 8
      %v1044 = vpop.permute.xlu0 %1043
      %1045 = vrot.lane.b32.xlu0 %v773, 8
      %v1046 = vpop.permute.xlu0 %1045
      %1047 = vrot.lane.b32.xlu0 %v774, 8
      %v1048 = vpop.permute.xlu0 %1047
      %1049 = vrot.lane.b32.xlu0 %v775, 8
      %v1050 = vpop.permute.xlu0 %1049
      %1051 = vrot.lane.b32.xlu0 %v776, 8
      %v1052 = vpop.permute.xlu0 %1051
      %1053 = vrot.lane.b32.xlu0 %v777, 8
      %v1054 = vpop.permute.xlu0 %1053
      %1055 = vrot.lane.b32.xlu0 %v778, 8
      %v1056 = vpop.permute.xlu0 %1055
      %1057 = vrot.lane.b32.xlu0 %v779, 8
      %v1058 = vpop.permute.xlu0 %1057
      %1059 = vrot.lane.b32.xlu0 %v780, 8
      %v1060 = vpop.permute.xlu0 %1059
      %1061 = vrot.lane.b32.xlu0 %v781, 8
      %v1062 = vpop.permute.xlu0 %1061
      %1063 = vrot.lane.b32.xlu0 %v782, 8
      %v1064 = vpop.permute.xlu0 %1063
      %1065 = vrot.lane.b32.xlu0 %v783, 8
      %v1066 = vpop.permute.xlu0 %1065
      %1067 = vrot.lane.b32.xlu0 %v784, 8
      %v1068 = vpop.permute.xlu0 %1067
      %1101 = vrot.lane.b32.xlu0 %v803, 12
      %v1102 = vpop.permute.xlu0 %1101
      %1103 = vrot.lane.b32.xlu0 %v804, 12
      %v1104 = vpop.permute.xlu0 %1103
      %1105 = vrot.lane.b32.xlu0 %v805, 12
      %v1106 = vpop.permute.xlu0 %1105
      %1107 = vrot.lane.b32.xlu0 %v806, 12
      %v1108 = vpop.permute.xlu0 %1107
      %1109 = vrot.lane.b32.xlu0 %v807, 12
      %v1110 = vpop.permute.xlu0 %1109
      %1111 = vrot.lane.b32.xlu0 %v808, 12
      %v1112 = vpop.permute.xlu0 %1111
      %1113 = vrot.lane.b32.xlu0 %v809, 12
      %v1114 = vpop.permute.xlu0 %1113
      %1115 = vrot.lane.b32.xlu0 %v810, 12
      %v1116 = vpop.permute.xlu0 %1115
      %1117 = vrot.lane.b32.xlu0 %v811, 12
      %v1118 = vpop.permute.xlu0 %1117
      %1119 = vrot.lane.b32.xlu0 %v812, 12
      %v1120 = vpop.permute.xlu0 %1119
      %1121 = vrot.lane.b32.xlu0 %v813, 12
      %v1122 = vpop.permute.xlu0 %1121
      %1123 = vrot.lane.b32.xlu0 %v814, 12
      %v1124 = vpop.permute.xlu0 %1123
      %1125 = vrot.lane.b32.xlu0 %v815, 12
      %v1126 = vpop.permute.xlu0 %1125
      %1127 = vrot.lane.b32.xlu0 %v816, 12
      %v1128 = vpop.permute.xlu0 %1127
      %1129 = vrot.lane.b32.xlu0 %v817, 12
      %v1130 = vpop.permute.xlu0 %1129
      %1131 = vrot.lane.b32.xlu0 %v818, 12
      %v1132 = vpop.permute.xlu0 %1131
      %1165 = vrot.lane.b32.xlu0 %v821, 16
      %v1166 = vpop.permute.xlu0 %1165
      %1167 = vrot.lane.b32.xlu0 %v822, 16
      %v1168 = vpop.permute.xlu0 %1167
      %1169 = vrot.lane.b32.xlu0 %v823, 16
      %v1170 = vpop.permute.xlu0 %1169
      %1171 = vrot.lane.b32.xlu0 %v824, 16
      %v1172 = vpop.permute.xlu0 %1171
      %1173 = vrot.lane.b32.xlu0 %v825, 16
      %v1174 = vpop.permute.xlu0 %1173
      %1175 = vrot.lane.b32.xlu0 %v826, 16
      %v1176 = vpop.permute.xlu0 %1175
      %1177 = vrot.lane.b32.xlu0 %v827, 16
      %v1178 = vpop.permute.xlu0 %1177
      %1179 = vrot.lane.b32.xlu0 %v828, 16
      %v1180 = vpop.permute.xlu0 %1179
      %1181 = vrot.lane.b32.xlu0 %v829, 16
      %v1182 = vpop.permute.xlu0 %1181
      %1183 = vrot.lane.b32.xlu0 %v830, 16
      %v1184 = vpop.permute.xlu0 %1183
      %1185 = vrot.lane.b32.xlu0 %v831, 16
      %v1186 = vpop.permute.xlu0 %1185
      %1187 = vrot.lane.b32.xlu0 %v832, 16
      %v1188 = vpop.permute.xlu0 %1187
      %1189 = vrot.lane.b32.xlu0 %v833, 16
      %v1190 = vpop.permute.xlu0 %1189
      %1191 = vrot.lane.b32.xlu0 %v834, 16
      %v1192 = vpop.permute.xlu0 %1191
      %1193 = vrot.lane.b32.xlu0 %v835, 16
      %v1194 = vpop.permute.xlu0 %1193
      %1195 = vrot.lane.b32.xlu0 %v836, 16
      %v1196 = vpop.permute.xlu0 %1195
      %1229 = vrot.lane.b32.xlu0 %v855, 20
      %v1230 = vpop.permute.xlu0 %1229
      %1231 = vrot.lane.b32.xlu0 %v856, 20
      %v1232 = vpop.permute.xlu0 %1231
      %1233 = vrot.lane.b32.xlu0 %v857, 20
      %v1234 = vpop.permute.xlu0 %1233
      %1235 = vrot.lane.b32.xlu0 %v858, 20
      %v1236 = vpop.permute.xlu0 %1235
      %1237 = vrot.lane.b32.xlu0 %v859, 20
      %v1238 = vpop.permute.xlu0 %1237
      %1239 = vrot.lane.b32.xlu0 %v860, 20
      %v1240 = vpop.permute.xlu0 %1239
      %1241 = vrot.lane.b32.xlu0 %v861, 20
      %v1242 = vpop.permute.xlu0 %1241
      %1243 = vrot.lane.b32.xlu0 %v862, 20
      %v1244 = vpop.permute.xlu0 %1243
      %1245 = vrot.lane.b32.xlu0 %v863, 20
      %v1246 = vpop.permute.xlu0 %1245
      %1247 = vrot.lane.b32.xlu0 %v864, 20
      %v1248 = vpop.permute.xlu0 %1247
      %1249 = vrot.lane.b32.xlu0 %v865, 20
      %v1250 = vpop.permute.xlu0 %1249
      %1251 = vrot.lane.b32.xlu0 %v866, 20
      %v1252 = vpop.permute.xlu0 %1251
      %1253 = vrot.lane.b32.xlu0 %v867, 20
      %v1254 = vpop.permute.xlu0 %1253
      %1255 = vrot.lane.b32.xlu0 %v868, 20
      %v1256 = vpop.permute.xlu0 %1255
      %1257 = vrot.lane.b32.xlu0 %v869, 20
      %v1258 = vpop.permute.xlu0 %1257
      %1259 = vrot.lane.b32.xlu0 %v870, 20
      %v1260 = vpop.permute.xlu0 %1259
      %1293 = vrot.lane.b32.xlu0 %v889, 24
      %v1294 = vpop.permute.xlu0 %1293
      %1295 = vrot.lane.b32.xlu0 %v890, 24
      %v1296 = vpop.permute.xlu0 %1295
      %1297 = vrot.lane.b32.xlu0 %v891, 24
      %v1298 = vpop.permute.xlu0 %1297
      %1299 = vrot.lane.b32.xlu0 %v892, 24
      %v1300 = vpop.permute.xlu0 %1299
      %1301 = vrot.lane.b32.xlu0 %v893, 24
      %v1302 = vpop.permute.xlu0 %1301
      %1303 = vrot.lane.b32.xlu0 %v894, 24
      %v1304 = vpop.permute.xlu0 %1303
      %1305 = vrot.lane.b32.xlu0 %v895, 24
      %v1306 = vpop.permute.xlu0 %1305
      %1307 = vrot.lane.b32.xlu0 %v896, 24
      %v1308 = vpop.permute.xlu0 %1307
      %1309 = vrot.lane.b32.xlu0 %v897, 24
      %v1310 = vpop.permute.xlu0 %1309
      %1311 = vrot.lane.b32.xlu0 %v898, 24
      %v1312 = vpop.permute.xlu0 %1311
      %1313 = vrot.lane.b32.xlu0 %v899, 24
      %v1314 = vpop.permute.xlu0 %1313
      %1315 = vrot.lane.b32.xlu0 %v900, 24
      %v1316 = vpop.permute.xlu0 %1315
      %1317 = vrot.lane.b32.xlu0 %v901, 24
      %v1318 = vpop.permute.xlu0 %1317
      %1319 = vrot.lane.b32.xlu0 %v902, 24
      %v1320 = vpop.permute.xlu0 %1319
      %1321 = vrot.lane.b32.xlu0 %v903, 24
      %v1322 = vpop.permute.xlu0 %1321
      %1323 = vrot.lane.b32.xlu0 %v904, 24
      %v1324 = vpop.permute.xlu0 %1323
      %1357 = vrot.lane.b32.xlu0 %v907, 28
      %v1358 = vpop.permute.xlu0 %1357
      %1359 = vrot.lane.b32.xlu0 %v908, 28
      %v1360 = vpop.permute.xlu0 %1359
      %1361 = vrot.lane.b32.xlu0 %v909, 28
      %v1362 = vpop.permute.xlu0 %1361
      %1363 = vrot.lane.b32.xlu0 %v910, 28
      %v1364 = vpop.permute.xlu0 %1363
      %1365 = vrot.lane.b32.xlu0 %v911, 28
      %v1366 = vpop.permute.xlu0 %1365
      %1367 = vrot.lane.b32.xlu0 %v912, 28
      %v1368 = vpop.permute.xlu0 %1367
      %1369 = vrot.lane.b32.xlu0 %v913, 28
      %v1370 = vpop.permute.xlu0 %1369
      %1371 = vrot.lane.b32.xlu0 %v914, 28
      %v1372 = vpop.permute.xlu0 %1371
      %1373 = vrot.lane.b32.xlu0 %v915, 28
      %v1374 = vpop.permute.xlu0 %1373
      %1375 = vrot.lane.b32.xlu0 %v916, 28
      %v1376 = vpop.permute.xlu0 %1375
      %1377 = vrot.lane.b32.xlu0 %v917, 28
      %v1378 = vpop.permute.xlu0 %1377
      %1379 = vrot.lane.b32.xlu0 %v918, 28
      %v1380 = vpop.permute.xlu0 %1379
      %1381 = vrot.lane.b32.xlu0 %v919, 28
      %v1382 = vpop.permute.xlu0 %1381
      %1383 = vrot.lane.b32.xlu0 %v920, 28
      %v1384 = vpop.permute.xlu0 %1383
      %1385 = vrot.lane.b32.xlu0 %v921, 28
      %v1386 = vpop.permute.xlu0 %1385
      %1387 = vrot.lane.b32.xlu0 %v922, 28
      %v1388 = vpop.permute.xlu0 %1387
      %1421 = vrot.lane.b32.xlu0 %v941, 32
      %v1422 = vpop.permute.xlu0 %1421
      %1423 = vrot.lane.b32.xlu0 %v942, 32
      %v1424 = vpop.permute.xlu0 %1423
      %1425 = vrot.lane.b32.xlu0 %v943, 32
      %v1426 = vpop.permute.xlu0 %1425
      %1427 = vrot.lane.b32.xlu0 %v944, 32
      %v1428 = vpop.permute.xlu0 %1427
      %1429 = vrot.lane.b32.xlu0 %v945, 32
      %v1430 = vpop.permute.xlu0 %1429
      %1431 = vrot.lane.b32.xlu0 %v946, 32
      %v1432 = vpop.permute.xlu0 %1431
      %1433 = vrot.lane.b32.xlu0 %v947, 32
      %v1434 = vpop.permute.xlu0 %1433
      %1435 = vrot.lane.b32.xlu0 %v948, 32
      %v1436 = vpop.permute.xlu0 %1435
      %1437 = vrot.lane.b32.xlu0 %v949, 32
      %v1438 = vpop.permute.xlu0 %1437
      %1439 = vrot.lane.b32.xlu0 %v950, 32
      %v1440 = vpop.permute.xlu0 %1439
      %1441 = vrot.lane.b32.xlu0 %v951, 32
      %v1442 = vpop.permute.xlu0 %1441
      %1443 = vrot.lane.b32.xlu0 %v952, 32
      %v1444 = vpop.permute.xlu0 %1443
      %1445 = vrot.lane.b32.xlu0 %v953, 32
      %v1446 = vpop.permute.xlu0 %1445
      %1447 = vrot.lane.b32.xlu0 %v954, 32
      %v1448 = vpop.permute.xlu0 %1447
      %1449 = vrot.lane.b32.xlu0 %v955, 32
      %v1450 = vpop.permute.xlu0 %1449
      %1451 = vrot.lane.b32.xlu0 %v956, 32
      %v1452 = vpop.permute.xlu0 %1451
      %vm1469 = vcmask 31744
      %v1470 = vsel %vm1469, %v622, %v974
      %v1471 = vsel %vm1469, %v623, %v976
      %v1472 = vsel %vm1469, %v624, %v978
      %v1473 = vsel %vm1469, %v625, %v980
      %v1474 = vsel %vm1469, %v626, %v982
      %v1475 = vsel %vm1469, %v627, %v984
      %v1476 = vsel %vm1469, %v628, %v986
      %v1477 = vsel %vm1469, %v629, %v988
      %v1478 = vsel %vm1469, %v630, %v990
      %v1479 = vsel %vm1469, %v631, %v992
      %v1480 = vsel %vm1469, %v632, %v994
      %v1481 = vsel %vm1469, %v633, %v996
      %v1482 = vsel %vm1469, %v634, %v998
      %v1483 = vsel %vm1469, %v635, %v1000
      %v1484 = vsel %vm1469, %v636, %v1002
      %v1485 = vsel %vm1469, %v637, %v1004
      %vm1486 = vcmask 64512
      %v1487 = vsel %vm1486, %v1470, %v1038
      %v1488 = vsel %vm1486, %v1471, %v1040
      %v1489 = vsel %vm1486, %v1472, %v1042
      %v1490 = vsel %vm1486, %v1473, %v1044
      %v1491 = vsel %vm1486, %v1474, %v1046
      %v1492 = vsel %vm1486, %v1475, %v1048
      %v1493 = vsel %vm1486, %v1476, %v1050
      %v1494 = vsel %vm1486, %v1477, %v1052
      %v1495 = vsel %vm1486, %v1478, %v1054
      %v1496 = vsel %vm1486, %v1479, %v1056
      %v1497 = vsel %vm1486, %v1480, %v1058
      %v1498 = vsel %vm1486, %v1481, %v1060
      %v1499 = vsel %vm1486, %v1482, %v1062
      %v1500 = vsel %vm1486, %v1483, %v1064
      %v1501 = vsel %vm1486, %v1484, %v1066
      %v1502 = vsel %vm1486, %v1485, %v1068
      %vm1503 = vcmask 97280
      %v1504 = vsel %vm1503, %v1487, %v1102
      %v1505 = vsel %vm1503, %v1488, %v1104
      %v1506 = vsel %vm1503, %v1489, %v1106
      %v1507 = vsel %vm1503, %v1490, %v1108
      %v1508 = vsel %vm1503, %v1491, %v1110
      %v1509 = vsel %vm1503, %v1492, %v1112
      %v1510 = vsel %vm1503, %v1493, %v1114
      %v1511 = vsel %vm1503, %v1494, %v1116
      %v1512 = vsel %vm1503, %v1495, %v1118
      %v1513 = vsel %vm1503, %v1496, %v1120
      %v1514 = vsel %vm1503, %v1497, %v1122
      %v1515 = vsel %vm1503, %v1498, %v1124
      %v1516 = vsel %vm1503, %v1499, %v1126
      %v1517 = vsel %vm1503, %v1500, %v1128
      %v1518 = vsel %vm1503, %v1501, %v1130
      %v1519 = vsel %vm1503, %v1502, %v1132
      %vm1520 = vcmask 130048
      %v1521 = vsel %vm1520, %v1504, %v1166
      %v1522 = vsel %vm1520, %v1505, %v1168
      %v1523 = vsel %vm1520, %v1506, %v1170
      %v1524 = vsel %vm1520, %v1507, %v1172
      %v1525 = vsel %vm1520, %v1508, %v1174
      %v1526 = vsel %vm1520, %v1509, %v1176
      %v1527 = vsel %vm1520, %v1510, %v1178
      %v1528 = vsel %vm1520, %v1511, %v1180
      %v1529 = vsel %vm1520, %v1512, %v1182
      %v1530 = vsel %vm1520, %v1513, %v1184
      %v1531 = vsel %vm1520, %v1514, %v1186
      %v1532 = vsel %vm1520, %v1515, %v1188
      %v1533 = vsel %vm1520, %v1516, %v1190
      %v1534 = vsel %vm1520, %v1517, %v1192
      %v1535 = vsel %vm1520, %v1518, %v1194
      %v1536 = vsel %vm1520, %v1519, %v1196
      %vm1537 = vcmask 162816
      %v1538 = vsel %vm1537, %v1521, %v1230
      %v1539 = vsel %vm1537, %v1522, %v1232
      %v1540 = vsel %vm1537, %v1523, %v1234
      %v1541 = vsel %vm1537, %v1524, %v1236
      %v1542 = vsel %vm1537, %v1525, %v1238
      %v1543 = vsel %vm1537, %v1526, %v1240
      %v1544 = vsel %vm1537, %v1527, %v1242
      %v1545 = vsel %vm1537, %v1528, %v1244
      %v1546 = vsel %vm1537, %v1529, %v1246
      %v1547 = vsel %vm1537, %v1530, %v1248
      %v1548 = vsel %vm1537, %v1531, %v1250
      %v1549 = vsel %vm1537, %v1532, %v1252
      %v1550 = vsel %vm1537, %v1533, %v1254
      %v1551 = vsel %vm1537, %v1534, %v1256
      %v1552 = vsel %vm1537, %v1535, %v1258
      %v1553 = vsel %vm1537, %v1536, %v1260
      %vm1554 = vcmask 195584
      %v1555 = vsel %vm1554, %v1538, %v1294
      %v1556 = vsel %vm1554, %v1539, %v1296
      %v1557 = vsel %vm1554, %v1540, %v1298
      %v1558 = vsel %vm1554, %v1541, %v1300
      %v1559 = vsel %vm1554, %v1542, %v1302
      %v1560 = vsel %vm1554, %v1543, %v1304
      %v1561 = vsel %vm1554, %v1544, %v1306
      %v1562 = vsel %vm1554, %v1545, %v1308
      %v1563 = vsel %vm1554, %v1546, %v1310
      %v1564 = vsel %vm1554, %v1547, %v1312
      %v1565 = vsel %vm1554, %v1548, %v1314
      %v1566 = vsel %vm1554, %v1549, %v1316
      %v1567 = vsel %vm1554, %v1550, %v1318
      %v1568 = vsel %vm1554, %v1551, %v1320
      %v1569 = vsel %vm1554, %v1552, %v1322
      %v1570 = vsel %vm1554, %v1553, %v1324
      %vm1571 = vcmask 228352
      %v1572 = vsel %vm1571, %v1555, %v1358
      %v1573 = vsel %vm1571, %v1556, %v1360
      %v1574 = vsel %vm1571, %v1557, %v1362
      %v1575 = vsel %vm1571, %v1558, %v1364
      %v1576 = vsel %vm1571, %v1559, %v1366
      %v1577 = vsel %vm1571, %v1560, %v1368
      %v1578 = vsel %vm1571, %v1561, %v1370
      %v1579 = vsel %vm1571, %v1562, %v1372
      %v1580 = vsel %vm1571, %v1563, %v1374
      %v1581 = vsel %vm1571, %v1564, %v1376
      %v1582 = vsel %vm1571, %v1565, %v1378
      %v1583 = vsel %vm1571, %v1566, %v1380
      %v1584 = vsel %vm1571, %v1567, %v1382
      %v1585 = vsel %vm1571, %v1568, %v1384
      %v1586 = vsel %vm1571, %v1569, %v1386
      %v1587 = vsel %vm1571, %v1570, %v1388
      %vm1588 = vcmask 261120
      %v1589 = vsel %vm1588, %v1572, %v1422
      %v1590 = vsel %vm1588, %v1573, %v1424
      %v1591 = vsel %vm1588, %v1574, %v1426
      %v1592 = vsel %vm1588, %v1575, %v1428
      %v1593 = vsel %vm1588, %v1576, %v1430
      %v1594 = vsel %vm1588, %v1577, %v1432
      %v1595 = vsel %vm1588, %v1578, %v1434
      %v1596 = vsel %vm1588, %v1579, %v1436
      %v1597 = vsel %vm1588, %v1580, %v1438
      %v1598 = vsel %vm1588, %v1581, %v1440
      %v1599 = vsel %vm1588, %v1582, %v1442
      %v1600 = vsel %vm1588, %v1583, %v1444
      %v1601 = vsel %vm1588, %v1584, %v1446
      %v1602 = vsel %vm1588, %v1585, %v1448
      %v1603 = vsel %vm1588, %v1586, %v1450
      %v1604 = vsel %vm1588, %v1587, %v1452
      %v1605 = vld [vmem:[%s1] sm:$0xff]
      %v1606 = vld [vmem:[%s1 + $0x8] sm:$0xff]
      %v1607 = vld [vmem:[%s1 + $0x10] sm:$0xff]
      %v1608 = vld [vmem:[%s1 + $0x18] sm:$0xff]
      %v1609 = vld [vmem:[%s1 + $0x20] sm:$0xf]
      %v1610 = vld [vmem:[%s2] sm:$0x1]
      %v1612 = vperm.slane %v1610, 0
      %vm1614 = vcmask 293888
      %v1616 = vsel %vm1614, %v1589, 0
      %v1619 = vsel %vm1614, %v1590, 0
      %v1622 = vsel %vm1614, %v1591, 0
      %v1625 = vsel %vm1614, %v1592, 0
      %v1628 = vsel %vm1614, %v1593, 0
      %v1631 = vsel %vm1614, %v1594, 0
      %v1634 = vsel %vm1614, %v1595, 0
      %v1637 = vsel %vm1614, %v1596, 0
      %v1640 = vsel %vm1614, %v1597, 0
      %v1643 = vsel %vm1614, %v1598, 0
      %v1646 = vsel %vm1614, %v1599, 0
      %v1649 = vsel %vm1614, %v1600, 0
      %v1652 = vsel %vm1614, %v1601, 0
      %v1655 = vsel %vm1614, %v1602, 0
      %v1658 = vsel %vm1614, %v1603, 0
      %v1661 = vsel %vm1614, %v1604, 0
      %vm1663 = vcmask 1043456
      %v1665 = vsel %vm1663, %v1609, 0
      %1667 = vmatpush.msra.mxu0 0.0
      %1668 = vmatpush.msra.mxu0 0.0
      %1669 = vmatpush.msra.mxu0 0.0
      %1670 = vmatpush.msra.mxu0 0.0
      %1671 = vmatpush.msra.mxu0 0.0
      %1672 = vmatpush.msra.mxu0 0.0
      %1673 = vmatpush.msra.mxu0 0.0
      %1674 = vmatpush.msra.mxu0 0.0
      %1675 = vmatpush.msra.mxu0 0.0
      %1676 = vmatpush.msra.mxu0 0.0
      %1677 = vmatpush.msra.mxu0 0.0
      %1678 = vmatpush.msra.mxu0 %v1665
      %1679 = vmatpush.msra.mxu0 %v1608
      %1680 = vmatpush.msra.mxu0 %v1607
      %1681 = vmatpush.msra.mxu0 %v1606
      %1682 = vmatpush.msra.mxu0 %v1605
      %1683 = vmatmul.f32.gmra.mxu0 %v1616
      %v1684 = vpop.f32.mrf.mxu0
      %v1685 = vadd.f32 %v1612, %v1684
      %1686 = vmatmul.f32.gmra.mxu0 %v1619
      %v1687 = vpop.f32.mrf.mxu0
      %v1688 = vadd.f32 %v1612, %v1687
      %1689 = vmatmul.f32.gmra.mxu0 %v1622
      %v1690 = vpop.f32.mrf.mxu0
      %v1691 = vadd.f32 %v1612, %v1690
      %1692 = vmatmul.f32.gmra.mxu0 %v1625
      %v1693 = vpop.f32.mrf.mxu0
      %v1694 = vadd.f32 %v1612, %v1693
      %1695 = vmatmul.f32.gmra.mxu0 %v1628
      %v1696 = vpop.f32.mrf.mxu0
      %v1697 = vadd.f32 %v1612, %v1696
      %1698 = vmatmul.f32.gmra.mxu0 %v1631
      %v1699 = vpop.f32.mrf.mxu0
      %v1700 = vadd.f32 %v1612, %v1699
      %1701 = vmatmul.f32.gmra.mxu0 %v1634
      %v1702 = vpop.f32.mrf.mxu0
      %v1703 = vadd.f32 %v1612, %v1702
      %1704 = vmatmul.f32.gmra.mxu0 %v1637
      %v1705 = vpop.f32.mrf.mxu0
      %v1706 = vadd.f32 %v1612, %v1705
      %1707 = vmatmul.f32.gmra.mxu0 %v1640
      %v1708 = vpop.f32.mrf.mxu0
      %v1709 = vadd.f32 %v1612, %v1708
      %1710 = vmatmul.f32.gmra.mxu0 %v1643
      %v1711 = vpop.f32.mrf.mxu0
      %v1712 = vadd.f32 %v1612, %v1711
      %1713 = vmatmul.f32.gmra.mxu0 %v1646
      %v1714 = vpop.f32.mrf.mxu0
      %v1715 = vadd.f32 %v1612, %v1714
      %1716 = vmatmul.f32.gmra.mxu0 %v1649
      %v1717 = vpop.f32.mrf.mxu0
      %v1718 = vadd.f32 %v1612, %v1717
      %1719 = vmatmul.f32.gmra.mxu0 %v1652
      %v1720 = vpop.f32.mrf.mxu0
      %v1721 = vadd.f32 %v1612, %v1720
      %1722 = vmatmul.f32.gmra.mxu0 %v1655
      %v1723 = vpop.f32.mrf.mxu0
      %v1724 = vadd.f32 %v1612, %v1723
      %1725 = vmatmul.f32.gmra.mxu0 %v1658
      %v1726 = vpop.f32.mrf.mxu0
      %v1727 = vadd.f32 %v1612, %v1726
      %1728 = vmatmul.f32.gmra.mxu0 %v1661
      %v1729 = vpop.f32.mrf.mxu0
      %v1730 = vadd.f32 %v1612, %v1729
      %1731 = vdwg.mxu0
      %v1732 = vld [vmem:[%s3] sm:$0x1]
      %vm1733 = vcmp.gt.f32.partialorder %v1685, 0.0
      %vm1734 = vcmp.gt.f32.partialorder %v1688, 0.0
      %vm1735 = vcmp.gt.f32.partialorder %v1691, 0.0
      %vm1736 = vcmp.gt.f32.partialorder %v1694, 0.0
      %vm1737 = vcmp.gt.f32.partialorder %v1697, 0.0
      %vm1738 = vcmp.gt.f32.partialorder %v1700, 0.0
      %vm1739 = vcmp.gt.f32.partialorder %v1703, 0.0
      %vm1740 = vcmp.gt.f32.partialorder %v1706, 0.0
      %vm1741 = vcmp.gt.f32.partialorder %v1709, 0.0
      %vm1742 = vcmp.gt.f32.partialorder %v1712, 0.0
      %vm1743 = vcmp.gt.f32.partialorder %v1715, 0.0
      %vm1744 = vcmp.gt.f32.partialorder %v1718, 0.0
      %vm1745 = vcmp.gt.f32.partialorder %v1721, 0.0
      %vm1746 = vcmp.gt.f32.partialorder %v1724, 0.0
      %vm1747 = vcmp.gt.f32.partialorder %v1727, 0.0
      %vm1748 = vcmp.gt.f32.partialorder %v1730, 0.0
      %v1750 = vperm.slane %v1732, 0
      %v1752 = vmul.f32 %v1750, %v1685
      %v1753 = vmul.f32 %v1750, %v1688
      %v1754 = vmul.f32 %v1750, %v1691
      %v1755 = vmul.f32 %v1750, %v1694
      %v1756 = vmul.f32 %v1750, %v1697
      %v1757 = vmul.f32 %v1750, %v1700
      %v1758 = vmul.f32 %v1750, %v1703
      %v1759 = vmul.f32 %v1750, %v1706
      %v1760 = vmul.f32 %v1750, %v1709
      %v1761 = vmul.f32 %v1750, %v1712
      %v1762 = vmul.f32 %v1750, %v1715
      %v1763 = vmul.f32 %v1750, %v1718
      %v1764 = vmul.f32 %v1750, %v1721
      %v1765 = vmul.f32 %v1750, %v1724
      %v1766 = vmul.f32 %v1750, %v1727
      %v1767 = vmul.f32 %v1750, %v1730
      %v1768 = vsel %vm1733, %v1685, %v1752
      %v1769 = vsel %vm1734, %v1688, %v1753
      %v1770 = vsel %vm1735, %v1691, %v1754
      %v1771 = vsel %vm1736, %v1694, %v1755
      %v1772 = vsel %vm1737, %v1697, %v1756
      %v1773 = vsel %vm1738, %v1700, %v1757
      %v1774 = vsel %vm1739, %v1703, %v1758
      %v1775 = vsel %vm1740, %v1706, %v1759
      %v1776 = vsel %vm1741, %v1709, %v1760
      %v1777 = vsel %vm1742, %v1712, %v1761
      %v1778 = vsel %vm1743, %v1715, %v1762
      %v1779 = vsel %vm1744, %v1718, %v1763
      %v1780 = vsel %vm1745, %v1721, %v1764
      %v1781 = vsel %vm1746, %v1724, %v1765
      %v1782 = vsel %vm1747, %v1727, %v1766
      %v1783 = vsel %vm1748, %v1730, %v1767
      %1784 = vst.msk [vmem:[%s219] sm:$0xff] %vm1520, %v1768
      %1785 = vst.msk [vmem:[%s219 + $0x8] sm:$0xff] %vm1520, %v1769
      %1786 = vst.msk [vmem:[%s219 + $0x10] sm:$0xff] %vm1520, %v1770
      %1787 = vst.msk [vmem:[%s219 + $0x18] sm:$0xff] %vm1520, %v1771
      %1788 = vst.msk [vmem:[%s219 + $0x20] sm:$0xff] %vm1520, %v1772
      %1789 = vst.msk [vmem:[%s219 + $0x28] sm:$0xff] %vm1520, %v1773
      %1790 = vst.msk [vmem:[%s219 + $0x30] sm:$0xff] %vm1520, %v1774
      %1791 = vst.msk [vmem:[%s219 + $0x38] sm:$0xff] %vm1520, %v1775
      %1792 = vst.msk [vmem:[%s219 + $0x40] sm:$0xff] %vm1520, %v1776
      %1793 = vst.msk [vmem:[%s219 + $0x48] sm:$0xff] %vm1520, %v1777
      %1794 = vst.msk [vmem:[%s219 + $0x50] sm:$0xff] %vm1520, %v1778
      %1795 = vst.msk [vmem:[%s219 + $0x58] sm:$0xff] %vm1520, %v1779
      %1796 = vst.msk [vmem:[%s219 + $0x60] sm:$0xff] %vm1520, %v1780
      %1797 = vst.msk [vmem:[%s219 + $0x68] sm:$0xff] %vm1520, %v1781
      %1798 = vst.msk [vmem:[%s219 + $0x70] sm:$0xff] %vm1520, %v1782
      %1799 = vst.msk [vmem:[%s219 + $0x78] sm:$0xff] %vm1520, %v1783
      %s1800 = smul.u32 16, %s20
      %p1801 = scmp.lt.s32.totalorder %s19, 1
      %s1802 = scalar_select %p1801, %s19, 1
      %p1803 = scmp.lt.s32.totalorder %s1800, 31
      %s1804 = scalar_select %p1803, %s1800, 31
      %s1805 = smul.addr %s1802, 32
      %s1806 = sadd.s32 %s1804, %s1805
      %s1807 = smul.addr %s1806, 8
      %s1808 = scalar_lea.vmem %s4, %s1807
      // Predicated region
      $region41: #{tpu_custom_call.1} parent=35 // pred_check
        %p1809 = pneg %p136
      $region42: #{tpu_custom_call.1} parent=35 // pred_check_branch
        %1811 = sbr.rel (%p1809) target = $region44
      $region43: #{tpu_custom_call.1} parent=35 // pred_region
        %s1812 = smul.u32 16, %s20
      $region44: #{tpu_custom_call.1} parent=35 // pred_fallthru
        _
    $region36: #{tpu_custom_call.1} parent=5 // pred_fallthru
      _
    %p1813 = scmp.le.s32.totalorder 2, %s10
    // Predicated region
    $region45: #{tpu_custom_call.1} parent=5 // pred_check
      %p1814 = pneg %p1813
    $region46: #{tpu_custom_call.1} parent=5 // pred_check_branch
      %1816 = sbr.rel (%p1814) target = $region48
    $region47: #{tpu_custom_call.1} parent=5 // pred_region
      %s1817 = ssub.s32 %s10, 2
      // Predicated region
      $region49: #{tpu_custom_call.1} parent=47 // pred_check
        %p1818 = pneg %p142
      $region50: #{tpu_custom_call.1} parent=47 // pred_check_branch
        %1820 = sbr.rel (%p1818) target = $region52
      $region51: #{tpu_custom_call.1} parent=47 // pred_region
        %s1821 = smul.u32 16, %s22
        %p1822 = scmp.lt.s32.totalorder %s21, 1
        %s1823 = scalar_select %p1822, %s21, 1
        %p1824 = scmp.lt.s32.totalorder %s1821, 31
        %s1825 = scalar_select %p1824, %s1821, 31
        %s1826 = smul.addr %s1823, 32
        %s1827 = sadd.s32 %s1825, %s1826
        %s1828 = smul.addr %s1827, 8
        %s1829 = scalar_lea.vmem %s4, %s1828
      $region52: #{tpu_custom_call.1} parent=47 // pred_fallthru
        _
    $region48: #{tpu_custom_call.1} parent=5 // pred_fallthru
      _
  $region6: #{tpu_custom_call.1} parent=0 // loop_footer
    %s14 = sadd.s32 1, %s10
  $region7: #{tpu_custom_call.1} parent=0 // loop_footer_branch
    %9 = sbr.rel target = $region3
  $region8: #{tpu_custom_call.1} parent=0 // loop_exit
    _

</llo_original>
